<compile_context>
chip_gen: v7x
topology: tpu7x:2x2x1
jax: 0.10.0
libtpu: 0.0.40
codegen_flags: <defaults>
</compile_context>

<pallas_src>
import jax
import jax.numpy as jnp
import numpy as np
from jax.experimental import pallas as pl
from jax.experimental.pallas import tpu as pltpu

KT = 25           # temporal kernel width of the first conv
KH = 18           # EEG-channel ("height") kernel of the second conv
NF = 40           # feature channels produced by the shallownet
EMB = 40          # embedding size (module default emb_size=40)
POOL = 75         # avg-pool window along time
POOL_STRIDE = 15  # avg-pool stride along time
BN_EPS = 1e-5
K_PAD = 512       # fused contraction dim (KT*KH = 450) padded to 128-multiple


def patch_embedding_kernel(x_ref, w_ref, b_ref, pool_ref, wp_ref, bp_ref,
                           o_ref):
    # x_ref block: (Bt, T, H) -- Bt batch elements, time x eeg-channel.
    Bt, T, H = x_ref.shape
    Tc = T - (KT - 1)                  # valid-conv output length along time
    pad_w = w_ref.shape[0] - KT * H    # zero pad of the contraction dim

    # ---- load shared operands / hoist loop-invariant values once ----------
    w = w_ref[...]                                            # (K_PAD, NF) bf16
    bias = b_ref[...]                                         # (1, NF) f32
    pool_t = pool_ref[...]                                    # (Wo, Tc) f32
    wp = wp_ref[...]                                          # (NF, emb) f32
    bp = bp_ref[...]                                          # (1, emb) f32
    x_bf = x_ref[...].astype(jnp.bfloat16)                    # cast block once
    zpad = jnp.zeros((Tc, pad_w), jnp.bfloat16)               # K pad 450->512

    # Bt is a static Python int -> fully unrolled; each batch element is
    # processed end-to-end and stored directly (no cross-batch relayouts).
    for b in range(Bt):
        xb = x_bf[b]                                          # (T, H)
        # -- im2col: (Tc, K_PAD) slab from 25 shifted slices on the lane axis
        cols = [xb[k:k + Tc, :] for k in range(KT)]           # 25 x (Tc, H)
        if pad_w:
            cols.append(zpad)
        slab = jnp.concatenate(cols, axis=1)                  # (Tc, K_PAD)

        # -- fused conv1 ∘ conv2 ∘ BatchNorm: ONE bf16 MXU matmul -----------
        y = jnp.dot(slab, w, preferred_element_type=jnp.float32) + bias

        # -- ELU(alpha=1) ----------------------------------------------------
        y = jnp.where(y > 0, y, jnp.exp(jnp.minimum(y, 0.0)) - 1.0)

        # -- AvgPool as matmul with pooling matrix, then 1x1-conv projection -
        pooled = jnp.dot(pool_t, y, preferred_element_type=jnp.float32)
        out = jnp.dot(pooled, wp, preferred_element_type=jnp.float32) + bp
        # Dropout(0.5) is identity at inference.
        o_ref[b] = out.astype(o_ref.dtype)                    # (Wo, emb)


def _choose_block_batch(B, max_bt=8):
    """Largest Bt <= max_bt dividing B while keeping grid length >= 2."""
    best = 1
    for bt in range(1, min(B, max_bt) + 1):
        if B % bt == 0 and B // bt >= 2:
            best = bt
    return best


def patch_embedding(x_nchw, params):
    B, Cin, H, T = x_nchw.shape
    assert Cin == 1 and H == KH
    Tc = T - (KT - 1)
    assert Tc >= POOL, "need T >= 99 so at least one pooling window fits"
    Wo = (Tc - POOL) // POOL_STRIDE + 1
    emb = params['wp'].shape[0]
    Bt = _choose_block_batch(B)

    # layout: NCHW -> (B, T, H): drop singleton channel, time on sublanes.
    x_bth = jnp.transpose(x_nchw[:, 0], (0, 2, 1)).astype(jnp.float32)

    # ---- fold conv1 + conv2 + BatchNorm (running stats) into one W / bias --
    w1 = params['w1'][:, 0, 0, :].astype(jnp.float32)         # (NF, KT)
    w2 = params['w2'][:, :, :, 0].astype(jnp.float32)         # (NF, NF, KH)
    scale = params['gamma'] / jnp.sqrt(params['var'] + BN_EPS)
    w_fused = jnp.einsum('ik,oih->kho', w1, w2) * scale[None, None, :]
    w_fused = w_fused.reshape(KT * KH, NF)
    w_fused = jnp.pad(w_fused, ((0, K_PAD - KT * KH), (0, 0)))
    w_fused = w_fused.astype(jnp.bfloat16)                    # (K_PAD, NF)
    b_conv = jnp.einsum('i,oih->o', params['b1'], w2) + params['b2']
    b_fused = ((b_conv - params['mean']) * scale
               + params['beta']).reshape(1, NF).astype(jnp.float32)

    # ---- pooling matrix: AvgPool2d((1,75),(1,15)) as one small matmul ------
    t_idx = jnp.arange(Tc)[None, :]
    w_idx = jnp.arange(Wo)[:, None]
    pool_t = (((t_idx >= w_idx * POOL_STRIDE)
               & (t_idx < w_idx * POOL_STRIDE + POOL))
              .astype(jnp.float32) / POOL)                    # (Wo, Tc)

    # ---- 1x1-conv projection ------------------------------------------------
    wp_t = jnp.transpose(params['wp'][:, :, 0, 0], (1, 0)).astype(jnp.float32)
    bp = params['bp'].reshape(1, emb).astype(jnp.float32)

    grid_spec = pltpu.PrefetchScalarGridSpec(
        num_scalar_prefetch=0,
        grid=(B // Bt,),
        in_specs=[
            pl.BlockSpec((Bt, T, H), lambda i: (i, 0, 0)),    # x
            pl.BlockSpec((K_PAD, NF), lambda i: (0, 0)),      # fused weight
            pl.BlockSpec((1, NF), lambda i: (0, 0)),          # fused bias
            pl.BlockSpec((Wo, Tc), lambda i: (0, 0)),         # pooling matrix
            pl.BlockSpec((NF, emb), lambda i: (0, 0)),        # projection W
            pl.BlockSpec((1, emb), lambda i: (0, 0)),         # projection b
        ],
        out_specs=pl.BlockSpec((Bt, Wo, emb), lambda i: (i, 0, 0)),
    )
    return pl.pallas_call(
        patch_embedding_kernel,
        out_shape=jax.ShapeDtypeStruct((B, Wo, emb), jnp.float32),
        grid_spec=grid_spec,
        compiler_params=pltpu.CompilerParams(
            dimension_semantics=("parallel",),
            vmem_limit_bytes=32 * 1024 * 1024),
    )(x_bth, w_fused, b_fused, pool_t, wp_t, bp)


def ref_forward(x, p):
    """Pure-JAX reference (mirrors the PyTorch forward in eval mode, f32)."""
    dn = ('NCHW', 'OIHW', 'NCHW')
    y = jax.lax.conv_general_dilated(x, p['w1'], (1, 1), 'VALID',
                                     dimension_numbers=dn)
    y = y + p['b1'][None, :, None, None]
    y = jax.lax.conv_general_dilated(y, p['w2'], (1, 1), 'VALID',
                                     dimension_numbers=dn)
    y = y + p['b2'][None, :, None, None]
    scale = p['gamma'] / jnp.sqrt(p['var'] + BN_EPS)
    y = (y - p['mean'][None, :, None, None]) * scale[None, :, None, None] \
        + p['beta'][None, :, None, None]
    y = jnp.where(y > 0, y, jnp.exp(jnp.minimum(y, 0.0)) - 1.0)      # ELU
    Tc = y.shape[-1]
    Wo = (Tc - POOL) // POOL_STRIDE + 1
    y = jnp.stack([jnp.mean(y[..., w * POOL_STRIDE: w * POOL_STRIDE + POOL],
                            axis=-1) for w in range(Wo)], axis=-1)   # (B,NF,1,Wo)
    y = jnp.einsum('bchw,ec->behw', y, p['wp'][:, :, 0, 0]) \
        + p['bp'][None, :, None, None]
    b, e, h, w = y.shape
    return jnp.transpose(y.reshape(b, e, h * w), (0, 2, 1))          # (B, h*w, E)


if __name__ == "__main__":
    key = jax.random.PRNGKey(0)
    ks = jax.random.split(key, 11)
    params = {
        'w1':    0.1 * jax.random.normal(ks[0], (NF, 1, 1, KT), jnp.float32),
        'b1':    0.1 * jax.random.normal(ks[1], (NF,), jnp.float32),
        'w2':    0.1 * jax.random.normal(ks[2], (NF, NF, KH, 1), jnp.float32),
        'b2':    0.1 * jax.random.normal(ks[3], (NF,), jnp.float32),
        'gamma': 1.0 + 0.1 * jax.random.normal(ks[4], (NF,), jnp.float32),
        'beta':  0.1 * jax.random.normal(ks[5], (NF,), jnp.float32),
        'mean':  0.1 * jax.random.normal(ks[6], (NF,), jnp.float32),
        'var':   jax.random.uniform(ks[7], (NF,), jnp.float32, 0.5, 1.5),
        'wp':    0.1 * jax.random.normal(ks[8], (EMB, NF, 1, 1), jnp.float32),
        'bp':    0.1 * jax.random.normal(ks[9], (EMB,), jnp.float32),
    }

    B, T = 2, 129   # 18 EEG channels, 129 time samples -> 3 output tokens
    x = jax.random.normal(ks[10], (B, 1, KH, T), jnp.float32)

    out = jax.block_until_ready(patch_embedding(x, params))
    ref = ref_forward(x, params)
    assert out.shape == (B, 3, EMB), out.shape
    # bf16 MXU matmul for the fused conv stack -> slightly looser tolerance
    # than the pure-f32 reference.
    np.testing.assert_allclose(np.asarray(out), np.asarray(ref),
                               rtol=1e-2, atol=1e-2)
    print("KERNEL_OK")
</pallas_src>

<mosaic_0001>
module attributes {stable_mosaic.version = 11 : i64} {
  func.func @patch_embedding_kernel(%arg0: i32, %arg1: memref<1x129x18xf32, #tpu.memory_space<vmem>>, %arg2: memref<512x40xbf16, #tpu.memory_space<vmem>>, %arg3: memref<1x40xf32, #tpu.memory_space<vmem>>, %arg4: memref<3x105xf32, #tpu.memory_space<vmem>>, %arg5: memref<40x40xf32, #tpu.memory_space<vmem>>, %arg6: memref<1x40xf32, #tpu.memory_space<vmem>>, %arg7: memref<1x3x40xf32, #tpu.memory_space<vmem>>) attributes {dimension_semantics = [#tpu.dimension_semantics<parallel>], iteration_bounds = array<i64: 2>, scalar_prefetch = 0 : i64, scratch_operands = 0 : i64, tpu.core_type = #tpu.core_type<tc>, window_params = [{transform_indices = @transform_0, window_bounds = array<i64: 1, 129, 18>}, {pipeline_mode = #tpu.pipeline_mode<synchronous>, transform_indices = @transform_1, window_bounds = array<i64: 512, 40>}, {pipeline_mode = #tpu.pipeline_mode<synchronous>, transform_indices = @transform_2, window_bounds = array<i64: 1, 40>}, {pipeline_mode = #tpu.pipeline_mode<synchronous>, transform_indices = @transform_3, window_bounds = array<i64: 3, 105>}, {pipeline_mode = #tpu.pipeline_mode<synchronous>, transform_indices = @transform_4, window_bounds = array<i64: 40, 40>}, {pipeline_mode = #tpu.pipeline_mode<synchronous>, transform_indices = @transform_5, window_bounds = array<i64: 1, 40>}, {transform_indices = @transform_6, window_bounds = array<i64: 1, 3, 40>}]} {
    %c0 = arith.constant 0 : index
    %c0_0 = arith.constant 0 : index
    %0 = vector.load %arg2[%c0, %c0_0] : memref<512x40xbf16, #tpu.memory_space<vmem>>, vector<512x40xbf16>
    %c0_1 = arith.constant 0 : index
    %c0_2 = arith.constant 0 : index
    %1 = vector.load %arg3[%c0_1, %c0_2] : memref<1x40xf32, #tpu.memory_space<vmem>>, vector<1x40xf32>
    %c0_3 = arith.constant 0 : index
    %c0_4 = arith.constant 0 : index
    %2 = vector.load %arg4[%c0_3, %c0_4] : memref<3x105xf32, #tpu.memory_space<vmem>>, vector<3x105xf32>
    %c0_5 = arith.constant 0 : index
    %c0_6 = arith.constant 0 : index
    %3 = vector.load %arg5[%c0_5, %c0_6] : memref<40x40xf32, #tpu.memory_space<vmem>>, vector<40x40xf32>
    %c0_7 = arith.constant 0 : index
    %c0_8 = arith.constant 0 : index
    %4 = vector.load %arg6[%c0_7, %c0_8] : memref<1x40xf32, #tpu.memory_space<vmem>>, vector<1x40xf32>
    %c0_9 = arith.constant 0 : index
    %c0_10 = arith.constant 0 : index
    %c0_11 = arith.constant 0 : index
    %5 = vector.load %arg1[%c0_9, %c0_10, %c0_11] : memref<1x129x18xf32, #tpu.memory_space<vmem>>, vector<1x129x18xf32>
    %6 = arith.truncf %5 : vector<1x129x18xf32> to vector<1x129x18xbf16>
    %cst = arith.constant 0.000000e+00 : bf16
    %7 = vector.broadcast %cst : bf16 to vector<105x62xbf16>
    %8 = vector.shape_cast %6 : vector<1x129x18xbf16> to vector<129x18xbf16>
    %9 = vector.extract_strided_slice %8 {offsets = [0, 0], sizes = [105, 18], strides = [1, 1]} : vector<129x18xbf16> to vector<105x18xbf16>
    %10 = vector.extract_strided_slice %8 {offsets = [1, 0], sizes = [105, 18], strides = [1, 1]} : vector<129x18xbf16> to vector<105x18xbf16>
    %11 = vector.extract_strided_slice %8 {offsets = [2, 0], sizes = [105, 18], strides = [1, 1]} : vector<129x18xbf16> to vector<105x18xbf16>
    %12 = vector.extract_strided_slice %8 {offsets = [3, 0], sizes = [105, 18], strides = [1, 1]} : vector<129x18xbf16> to vector<105x18xbf16>
    %13 = vector.extract_strided_slice %8 {offsets = [4, 0], sizes = [105, 18], strides = [1, 1]} : vector<129x18xbf16> to vector<105x18xbf16>
    %14 = vector.extract_strided_slice %8 {offsets = [5, 0], sizes = [105, 18], strides = [1, 1]} : vector<129x18xbf16> to vector<105x18xbf16>
    %15 = vector.extract_strided_slice %8 {offsets = [6, 0], sizes = [105, 18], strides = [1, 1]} : vector<129x18xbf16> to vector<105x18xbf16>
    %16 = vector.extract_strided_slice %8 {offsets = [7, 0], sizes = [105, 18], strides = [1, 1]} : vector<129x18xbf16> to vector<105x18xbf16>
    %17 = vector.extract_strided_slice %8 {offsets = [8, 0], sizes = [105, 18], strides = [1, 1]} : vector<129x18xbf16> to vector<105x18xbf16>
    %18 = vector.extract_strided_slice %8 {offsets = [9, 0], sizes = [105, 18], strides = [1, 1]} : vector<129x18xbf16> to vector<105x18xbf16>
    %19 = vector.extract_strided_slice %8 {offsets = [10, 0], sizes = [105, 18], strides = [1, 1]} : vector<129x18xbf16> to vector<105x18xbf16>
    %20 = vector.extract_strided_slice %8 {offsets = [11, 0], sizes = [105, 18], strides = [1, 1]} : vector<129x18xbf16> to vector<105x18xbf16>
    %21 = vector.extract_strided_slice %8 {offsets = [12, 0], sizes = [105, 18], strides = [1, 1]} : vector<129x18xbf16> to vector<105x18xbf16>
    %22 = vector.extract_strided_slice %8 {offsets = [13, 0], sizes = [105, 18], strides = [1, 1]} : vector<129x18xbf16> to vector<105x18xbf16>
    %23 = vector.extract_strided_slice %8 {offsets = [14, 0], sizes = [105, 18], strides = [1, 1]} : vector<129x18xbf16> to vector<105x18xbf16>
    %24 = vector.extract_strided_slice %8 {offsets = [15, 0], sizes = [105, 18], strides = [1, 1]} : vector<129x18xbf16> to vector<105x18xbf16>
    %25 = vector.extract_strided_slice %8 {offsets = [16, 0], sizes = [105, 18], strides = [1, 1]} : vector<129x18xbf16> to vector<105x18xbf16>
    %26 = vector.extract_strided_slice %8 {offsets = [17, 0], sizes = [105, 18], strides = [1, 1]} : vector<129x18xbf16> to vector<105x18xbf16>
    %27 = vector.extract_strided_slice %8 {offsets = [18, 0], sizes = [105, 18], strides = [1, 1]} : vector<129x18xbf16> to vector<105x18xbf16>
    %28 = vector.extract_strided_slice %8 {offsets = [19, 0], sizes = [105, 18], strides = [1, 1]} : vector<129x18xbf16> to vector<105x18xbf16>
    %29 = vector.extract_strided_slice %8 {offsets = [20, 0], sizes = [105, 18], strides = [1, 1]} : vector<129x18xbf16> to vector<105x18xbf16>
    %30 = vector.extract_strided_slice %8 {offsets = [21, 0], sizes = [105, 18], strides = [1, 1]} : vector<129x18xbf16> to vector<105x18xbf16>
    %31 = vector.extract_strided_slice %8 {offsets = [22, 0], sizes = [105, 18], strides = [1, 1]} : vector<129x18xbf16> to vector<105x18xbf16>
    %32 = vector.extract_strided_slice %8 {offsets = [23, 0], sizes = [105, 18], strides = [1, 1]} : vector<129x18xbf16> to vector<105x18xbf16>
    %33 = vector.extract_strided_slice %8 {offsets = [24, 0], sizes = [105, 18], strides = [1, 1]} : vector<129x18xbf16> to vector<105x18xbf16>
    %34 = tpu.concatenate %9, %10, %11, %12, %13, %14, %15, %16, %17, %18, %19, %20, %21, %22, %23, %24 in 1 : vector<105x18xbf16>, vector<105x18xbf16>, vector<105x18xbf16>, vector<105x18xbf16>, vector<105x18xbf16>, vector<105x18xbf16>, vector<105x18xbf16>, vector<105x18xbf16>, vector<105x18xbf16>, vector<105x18xbf16>, vector<105x18xbf16>, vector<105x18xbf16>, vector<105x18xbf16>, vector<105x18xbf16>, vector<105x18xbf16>, vector<105x18xbf16> -> vector<105x288xbf16>
    %35 = tpu.concatenate %25, %26, %27, %28, %29, %30, %31, %32, %33, %7 in 1 : vector<105x18xbf16>, vector<105x18xbf16>, vector<105x18xbf16>, vector<105x18xbf16>, vector<105x18xbf16>, vector<105x18xbf16>, vector<105x18xbf16>, vector<105x18xbf16>, vector<105x18xbf16>, vector<105x62xbf16> -> vector<105x224xbf16>
    %36 = tpu.concatenate %34, %35 in 1 : vector<105x288xbf16>, vector<105x224xbf16> -> vector<105x512xbf16>
    %cst_12 = arith.constant dense<0.000000e+00> : vector<105x40xf32>
    %37 = tpu.matmul %36, %0, %cst_12 {dimension_numbers = #tpu.dot_dimension_numbers<[1], [0], [0], [1], [0, 0, 1, 1], [], []>} : vector<105x512xbf16>, vector<512x40xbf16>, vector<105x40xf32> -> vector<105x40xf32>
    %38 = vector.broadcast %1 : vector<1x40xf32> to vector<105x40xf32>
    %39 = arith.addf %37, %38 : vector<105x40xf32>
    %cst_13 = arith.constant 0.000000e+00 : f32
    %40 = vector.broadcast %cst_13 : f32 to vector<105x40xf32>
    %41 = arith.cmpf ogt, %39, %40 : vector<105x40xf32>
    %cst_14 = arith.constant 0.000000e+00 : f32
    %42 = vector.broadcast %cst_14 : f32 to vector<105x40xf32>
    %43 = arith.minimumf %39, %42 : vector<105x40xf32>
    %44 = math.exp %43 : vector<105x40xf32>
    %cst_15 = arith.constant 1.000000e+00 : f32
    %45 = vector.broadcast %cst_15 : f32 to vector<105x40xf32>
    %46 = arith.subf %44, %45 : vector<105x40xf32>
    %47 = arith.select %41, %39, %46 : vector<105x40xi1>, vector<105x40xf32>
    %cst_16 = arith.constant dense<0.000000e+00> : vector<3x40xf32>
    %48 = tpu.matmul %2, %47, %cst_16 {dimension_numbers = #tpu.dot_dimension_numbers<[1], [0], [0], [1], [0, 0, 1, 1], [], []>} : vector<3x105xf32>, vector<105x40xf32>, vector<3x40xf32> -> vector<3x40xf32>
    %cst_17 = arith.constant dense<0.000000e+00> : vector<3x40xf32>
    %49 = tpu.matmul %48, %3, %cst_17 {dimension_numbers = #tpu.dot_dimension_numbers<[1], [0], [0], [1], [0, 0, 1, 1], [], []>} : vector<3x40xf32>, vector<40x40xf32>, vector<3x40xf32> -> vector<3x40xf32>
    %50 = vector.broadcast %4 : vector<1x40xf32> to vector<3x40xf32>
    %51 = arith.addf %49, %50 : vector<3x40xf32>
    %c0_18 = arith.constant 0 : index
    %c0_19 = arith.constant 0 : index
    %c0_20 = arith.constant 0 : index
    %52 = vector.load %arg7[%c0_18, %c0_19, %c0_20] : memref<1x3x40xf32, #tpu.memory_space<vmem>>, vector<1x3x40xf32>
    %53 = vector.shape_cast %52 : vector<1x3x40xf32> to vector<3x40xf32>
    %54 = vector.shape_cast %51 : vector<3x40xf32> to vector<1x3x40xf32>
    tpu.vector_store %arg7[%c0_18, %c0_19, %c0_20], %54 {strides = array<i32>} : memref<1x3x40xf32, #tpu.memory_space<vmem>>, vector<1x3x40xf32>,
    return
  }
  func.func @transform_0(%arg0: i32) -> (i32, i32, i32) {
    %c0_i32 = arith.constant 0 : i32
    %c0_i32_0 = arith.constant 0 : i32
    %c0_i32_1 = arith.constant 0 : i32
    return %arg0, %c0_i32, %c0_i32_0 : i32, i32, i32
  }
  func.func @transform_1(%arg0: i32) -> (i32, i32) {
    %c0_i32 = arith.constant 0 : i32
    %c0_i32_0 = arith.constant 0 : i32
    %c0_i32_1 = arith.constant 0 : i32
    return %c0_i32, %c0_i32_0 : i32, i32
  }
  func.func @transform_2(%arg0: i32) -> (i32, i32) {
    %c0_i32 = arith.constant 0 : i32
    %c0_i32_0 = arith.constant 0 : i32
    %c0_i32_1 = arith.constant 0 : i32
    return %c0_i32, %c0_i32_0 : i32, i32
  }
  func.func @transform_3(%arg0: i32) -> (i32, i32) {
    %c0_i32 = arith.constant 0 : i32
    %c0_i32_0 = arith.constant 0 : i32
    %c0_i32_1 = arith.constant 0 : i32
    return %c0_i32, %c0_i32_0 : i32, i32
  }
  func.func @transform_4(%arg0: i32) -> (i32, i32) {
    %c0_i32 = arith.constant 0 : i32
    %c0_i32_0 = arith.constant 0 : i32
    %c0_i32_1 = arith.constant 0 : i32
    return %c0_i32, %c0_i32_0 : i32, i32
  }
  func.func @transform_5(%arg0: i32) -> (i32, i32) {
    %c0_i32 = arith.constant 0 : i32
    %c0_i32_0 = arith.constant 0 : i32
    %c0_i32_1 = arith.constant 0 : i32
    return %c0_i32, %c0_i32_0 : i32, i32
  }
  func.func @transform_6(%arg0: i32) -> (i32, i32, i32) {
    %c0_i32 = arith.constant 0 : i32
    %c0_i32_0 = arith.constant 0 : i32
    %c0_i32_1 = arith.constant 0 : i32
    return %arg0, %c0_i32, %c0_i32_0 : i32, i32, i32
  }
}

</mosaic_0001>

<llo_original>
// kernel: tpu_custom_call.1
$region0: #{tpu_custom_call.1}
  #allocation0 [shape = 'u32[]', space=smem, size = 0x4, offset = 0x4, fixed_abs, tag = 'smem constant byte address 0x4 - core index']
  #allocation1 [shape = 'u32[144,128]{1,0:T(1,128)}', space=vmem, size = 0x12000, scoped, tag = 'internal scratch']
  %s0 = inlined_call_operand.vmem [shape: f32[2,129,18], index: 0, kind: input, shape index: {}]
  %s1 = inlined_call_operand.vmem [shape: bf16[512,40], index: 1, kind: input, shape index: {}]
  %s2 = inlined_call_operand.vmem [shape: f32[1,40], index: 2, kind: input, shape index: {}]
  %s3 = inlined_call_operand.vmem [shape: f32[3,105], index: 3, kind: input, shape index: {}]
  %s4 = inlined_call_operand.vmem [shape: f32[40,40], index: 4, kind: input, shape index: {}]
  %s5 = inlined_call_operand.vmem [shape: f32[1,40], index: 5, kind: input, shape index: {}]
  %s6 = inlined_call_operand.vmem [shape: f32[2,3,40], index: 6, kind: output, shape index: {}]
  %s7 = sld [smem:[#allocation0]]
  $region57: #{tpu_custom_call.1} parent=0
    _
  %s9 = ssub.s32 1, %s7
  %s10 = scalar_select 0, %s9, %s7
  loop: start=0, step=1, limit=4
  $region2: #{tpu_custom_call.1} parent=0 // loop_pre_header
    _
  $region3: #{tpu_custom_call.1} parent=0 // loop_header
    %s12 = sphi 0, %s16
    %p13 = scmp.ge.s32.totalorder %s12, 4
    %s22 = sphi 0, %s24
    %s25 = sphi 0, %s22
    %s26 = sphi 0, %s25
    %s42 = sphi 0, %s26
    %s46 = sphi 0, %s46
    %s48 = sphi 0, %s46
    %s49 = sphi 0, %s48
    %s63 = sphi 0, %s49
    %s67 = sphi 0, %s67
    %s69 = sphi 0, %s67
    %s70 = sphi 0, %s69
    %s84 = sphi 0, %s70
    %s88 = sphi 0, %s88
    %s90 = sphi 0, %s88
    %s91 = sphi 0, %s90
    %s105 = sphi 0, %s91
    %s109 = sphi 0, %s109
    %s111 = sphi 0, %s109
    %s112 = sphi 0, %s111
    %s126 = sphi 0, %s112
    %s130 = sphi 0, %s130
    %s132 = sphi 0, %s130
    %s133 = sphi 0, %s132
    %s147 = sphi 0, %s133
    %s153 = sphi 0, %s155
    %s156 = sphi 0, %s153
    %s157 = sphi 0, %s156
    %s173 = sphi 0, %s157
  $region4: #{tpu_custom_call.1} parent=0 // loop_header_branch
    %15 = sbr.rel (%p13) target = $region8
  $region5: #{tpu_custom_call.1} parent=0 // loop_body
    %s17 = ssub.s32 %s12, 1
    %s18 = ssub.s32 %s12, 2
    %s19 = sadd.s32 %s12, 1
    %s20 = ssub.s32 %s12, %s19
    %p21 = scmp.eq.s32.totalorder %s20, 0
    %s23 = sadd.s32 %s22, 1
    %s24 = scalar_select %p21, %s22, %s23
    %p27 = pneg %p21
    %p28 = scmp.eq.s32.totalorder %s12, 1
    %p29 = por %p27, %p28
    %p30 = scmp.ne.s32.totalorder %s22, %s25
    %p31 = scmp.eq.s32.totalorder %s12, 0
    %p32 = por %p30, %p31
    %p33 = scmp.ne.s32.totalorder %s22, %s25
    %p34 = scmp.eq.s32.totalorder %s17, 1
    %p35 = por %p33, %p34
    %p36 = scmp.ne.s32.totalorder %s25, %s26
    %p37 = scmp.eq.s32.totalorder %s17, 0
    %p38 = por %p36, %p37
    %p39 = scmp.ne.s32.totalorder %s25, %s26
    %p40 = scmp.eq.s32.totalorder %s18, 1
    %p41 = por %p39, %p40
    %p43 = scmp.ne.s32.totalorder %s26, %s42
    %p44 = scmp.eq.s32.totalorder %s18, 0
    %p45 = por %p43, %p44
    %s47 = sadd.s32 %s46, 1
    %p50 = scmp.eq.s32.totalorder %s12, 1
    %p51 = scmp.ne.s32.totalorder %s46, %s48
    %p52 = scmp.eq.s32.totalorder %s12, 0
    %p53 = por %p51, %p52
    %p54 = scmp.ne.s32.totalorder %s46, %s48
    %p55 = scmp.eq.s32.totalorder %s17, 1
    %p56 = por %p54, %p55
    %p57 = scmp.ne.s32.totalorder %s48, %s49
    %p58 = scmp.eq.s32.totalorder %s17, 0
    %p59 = por %p57, %p58
    %p60 = scmp.ne.s32.totalorder %s48, %s49
    %p61 = scmp.eq.s32.totalorder %s18, 1
    %p62 = por %p60, %p61
    %p64 = scmp.ne.s32.totalorder %s49, %s63
    %p65 = scmp.eq.s32.totalorder %s18, 0
    %p66 = por %p64, %p65
    %s68 = sadd.s32 %s67, 1
    %p71 = scmp.eq.s32.totalorder %s12, 1
    %p72 = scmp.ne.s32.totalorder %s67, %s69
    %p73 = scmp.eq.s32.totalorder %s12, 0
    %p74 = por %p72, %p73
    %p75 = scmp.ne.s32.totalorder %s67, %s69
    %p76 = scmp.eq.s32.totalorder %s17, 1
    %p77 = por %p75, %p76
    %p78 = scmp.ne.s32.totalorder %s69, %s70
    %p79 = scmp.eq.s32.totalorder %s17, 0
    %p80 = por %p78, %p79
    %p81 = scmp.ne.s32.totalorder %s69, %s70
    %p82 = scmp.eq.s32.totalorder %s18, 1
    %p83 = por %p81, %p82
    %p85 = scmp.ne.s32.totalorder %s70, %s84
    %p86 = scmp.eq.s32.totalorder %s18, 0
    %p87 = por %p85, %p86
    %s89 = sadd.s32 %s88, 1
    %p92 = scmp.eq.s32.totalorder %s12, 1
    %p93 = scmp.ne.s32.totalorder %s88, %s90
    %p94 = scmp.eq.s32.totalorder %s12, 0
    %p95 = por %p93, %p94
    %p96 = scmp.ne.s32.totalorder %s88, %s90
    %p97 = scmp.eq.s32.totalorder %s17, 1
    %p98 = por %p96, %p97
    %p99 = scmp.ne.s32.totalorder %s90, %s91
    %p100 = scmp.eq.s32.totalorder %s17, 0
    %p101 = por %p99, %p100
    %p102 = scmp.ne.s32.totalorder %s90, %s91
    %p103 = scmp.eq.s32.totalorder %s18, 1
    %p104 = por %p102, %p103
    %p106 = scmp.ne.s32.totalorder %s91, %s105
    %p107 = scmp.eq.s32.totalorder %s18, 0
    %p108 = por %p106, %p107
    %s110 = sadd.s32 %s109, 1
    %p113 = scmp.eq.s32.totalorder %s12, 1
    %p114 = scmp.ne.s32.totalorder %s109, %s111
    %p115 = scmp.eq.s32.totalorder %s12, 0
    %p116 = por %p114, %p115
    %p117 = scmp.ne.s32.totalorder %s109, %s111
    %p118 = scmp.eq.s32.totalorder %s17, 1
    %p119 = por %p117, %p118
    %p120 = scmp.ne.s32.totalorder %s111, %s112
    %p121 = scmp.eq.s32.totalorder %s17, 0
    %p122 = por %p120, %p121
    %p123 = scmp.ne.s32.totalorder %s111, %s112
    %p124 = scmp.eq.s32.totalorder %s18, 1
    %p125 = por %p123, %p124
    %p127 = scmp.ne.s32.totalorder %s112, %s126
    %p128 = scmp.eq.s32.totalorder %s18, 0
    %p129 = por %p127, %p128
    %s131 = sadd.s32 %s130, 1
    %p134 = scmp.eq.s32.totalorder %s12, 1
    %p135 = scmp.ne.s32.totalorder %s130, %s132
    %p136 = scmp.eq.s32.totalorder %s12, 0
    %p137 = por %p135, %p136
    %p138 = scmp.ne.s32.totalorder %s130, %s132
    %p139 = scmp.eq.s32.totalorder %s17, 1
    %p140 = por %p138, %p139
    %p141 = scmp.ne.s32.totalorder %s132, %s133
    %p142 = scmp.eq.s32.totalorder %s17, 0
    %p143 = por %p141, %p142
    %p144 = scmp.ne.s32.totalorder %s132, %s133
    %p145 = scmp.eq.s32.totalorder %s18, 1
    %p146 = por %p144, %p145
    %p148 = scmp.ne.s32.totalorder %s133, %s147
    %p149 = scmp.eq.s32.totalorder %s18, 0
    %p150 = por %p148, %p149
    %s151 = ssub.s32 %s12, %s19
    %p152 = scmp.eq.s32.totalorder %s151, 0
    %s154 = sadd.s32 %s153, 1
    %s155 = scalar_select %p152, %s153, %s154
    %p158 = pneg %p152
    %p159 = scmp.eq.s32.totalorder %s12, 1
    %p160 = por %p158, %p159
    %p161 = scmp.ne.s32.totalorder %s153, %s156
    %p162 = scmp.eq.s32.totalorder %s12, 0
    %p163 = por %p161, %p162
    %p164 = scmp.ne.s32.totalorder %s153, %s156
    %p165 = scmp.eq.s32.totalorder %s17, 1
    %p166 = por %p164, %p165
    %p167 = scmp.ne.s32.totalorder %s156, %s157
    %p168 = scmp.eq.s32.totalorder %s17, 0
    %p169 = por %p167, %p168
    %p170 = scmp.ne.s32.totalorder %s156, %s157
    %p171 = scmp.eq.s32.totalorder %s18, 1
    %p172 = por %p170, %p171
    %p174 = scmp.ne.s32.totalorder %s157, %s173
    %p175 = scmp.eq.s32.totalorder %s18, 0
    %p176 = por %p174, %p175
    %p177 = scmp.le.s32.totalorder 1, %s12
    %p178 = scmp.lt.s32.totalorder %s12, 3
    %p179 = pnand %p177, %p178
    %p180 = pneg %p179
    // Predicated region
    $region9: #{tpu_custom_call.1} parent=5 // pred_check
      _
    $region10: #{tpu_custom_call.1} parent=5 // pred_check_branch
      %182 = sbr.rel (%p179) target = $region12
    $region11: #{tpu_custom_call.1} parent=5 // pred_region
      %s183 = ssub.s32 %s12, 1
      // Predicated region
      $region13: #{tpu_custom_call.1} parent=11 // pred_check
        %p184 = pneg %p59
      $region14: #{tpu_custom_call.1} parent=11 // pred_check_branch
        %186 = sbr.rel (%p184) target = $region16
      $region15: #{tpu_custom_call.1} parent=11 // pred_region
        _
      $region16: #{tpu_custom_call.1} parent=11 // pred_fallthru
        _
      // Predicated region
      $region17: #{tpu_custom_call.1} parent=11 // pred_check
        %p187 = pneg %p80
      $region18: #{tpu_custom_call.1} parent=11 // pred_check_branch
        %189 = sbr.rel (%p187) target = $region20
      $region19: #{tpu_custom_call.1} parent=11 // pred_region
        _
      $region20: #{tpu_custom_call.1} parent=11 // pred_fallthru
        _
      // Predicated region
      $region21: #{tpu_custom_call.1} parent=11 // pred_check
        %p190 = pneg %p101
      $region22: #{tpu_custom_call.1} parent=11 // pred_check_branch
        %192 = sbr.rel (%p190) target = $region24
      $region23: #{tpu_custom_call.1} parent=11 // pred_region
        _
      $region24: #{tpu_custom_call.1} parent=11 // pred_fallthru
        _
      // Predicated region
      $region25: #{tpu_custom_call.1} parent=11 // pred_check
        %p193 = pneg %p122
      $region26: #{tpu_custom_call.1} parent=11 // pred_check_branch
        %195 = sbr.rel (%p193) target = $region28
      $region27: #{tpu_custom_call.1} parent=11 // pred_region
        _
      $region28: #{tpu_custom_call.1} parent=11 // pred_fallthru
        _
      // Predicated region
      $region29: #{tpu_custom_call.1} parent=11 // pred_check
        %p196 = pneg %p143
      $region30: #{tpu_custom_call.1} parent=11 // pred_check_branch
        %198 = sbr.rel (%p196) target = $region32
      $region31: #{tpu_custom_call.1} parent=11 // pred_region
        _
      $region32: #{tpu_custom_call.1} parent=11 // pred_fallthru
        _
    $region12: #{tpu_custom_call.1} parent=5 // pred_fallthru
      _
    %p199 = scmp.lt.s32.totalorder %s12, 2
    // Predicated region
    $region33: #{tpu_custom_call.1} parent=5 // pred_check
      %p200 = pneg %p199
    $region34: #{tpu_custom_call.1} parent=5 // pred_check_branch
      %202 = sbr.rel (%p200) target = $region36
    $region35: #{tpu_custom_call.1} parent=5 // pred_region
      // Predicated region
      $region37: #{tpu_custom_call.1} parent=35 // pred_check
        %p203 = pneg %p32
      $region38: #{tpu_custom_call.1} parent=35 // pred_check_branch
        %205 = sbr.rel (%p203) target = $region40
      $region39: #{tpu_custom_call.1} parent=35 // pred_region
        %p206 = scmp.lt.s32.totalorder %s12, 1
        %s207 = scalar_select %p206, %s12, 1
        %s208 = smul.addr %s207, 17
        %s209 = smul.addr %s208, 8
        %s210 = scalar_lea.vmem %s0, %s209
      $region40: #{tpu_custom_call.1} parent=35 // pred_fallthru
        _
    $region36: #{tpu_custom_call.1} parent=5 // pred_fallthru
      _
    %p211 = scmp.le.s32.totalorder 1, %s12
    %p212 = scmp.lt.s32.totalorder %s12, 3
    %p213 = pnand %p211, %p212
    %p214 = pneg %p213
    // Predicated region
    $region41: #{tpu_custom_call.1} parent=5 // pred_check
      _
    $region42: #{tpu_custom_call.1} parent=5 // pred_check_branch
      %216 = sbr.rel (%p213) target = $region44
    $region43: #{tpu_custom_call.1} parent=5 // pred_region
      %s217 = ssub.s32 %s12, 1
      %p218 = scmp.lt.s32.totalorder %s17, 1
      %s219 = scalar_select %p218, %s17, 1
      %s220 = smul.addr %s219, 17
      %s221 = smul.addr %s220, 8
      %s222 = scalar_lea.vmem %s0, %s221
      %p223 = pneg %p38
      %p224 = pneg %p35
      %p225 = pneg %p59
      %p226 = pneg %p56
      %p227 = pneg %p80
      %p228 = pneg %p77
      %p229 = pneg %p101
      %p230 = pneg %p98
      %p231 = pneg %p122
      %p232 = pneg %p119
      %p233 = pneg %p143
      %p234 = pneg %p140
      %p235 = pneg %p169
      %p236 = pneg %p166
      %p237 = scmp.lt.s32.totalorder %s17, 1
      %s238 = scalar_select %p237, %s17, 1
      %s239 = smul.addr %s238, 4
      %s240 = scalar_lea.vmem %s6, %s239
      %p241 = scmp.lt.s32.totalorder %s17, 1
      %s242 = scalar_select %p241, %s17, 1
      %s243 = smul.addr %s242, 17
      %s244 = smul.addr %s243, 8
      %s245 = scalar_lea.vmem %s0, %s244
      %p246 = scmp.lt.s32.totalorder %s17, 1
      %s247 = scalar_select %p246, %s17, 1
      %s248 = smul.addr %s247, 4
      %s249 = scalar_lea.vmem %s6, %s248
      %v251 = vld [vmem:[%s1] sm:$0xf]
      %v252 = vld [vmem:[%s1 + $0x4] sm:$0xf]
      %v253 = vld [vmem:[%s1 + $0x8] sm:$0xf]
      %v254 = vld [vmem:[%s1 + $0xc] sm:$0xf]
      %v255 = vld [vmem:[%s1 + $0x10] sm:$0xf]
      %v256 = vld [vmem:[%s1 + $0x14] sm:$0xf]
      %v257 = vld [vmem:[%s1 + $0x18] sm:$0xf]
      %v258 = vld [vmem:[%s1 + $0x1c] sm:$0xf]
      %v259 = vld [vmem:[%s1 + $0x20] sm:$0xf]
      %v260 = vld [vmem:[%s1 + $0x24] sm:$0xf]
      %v261 = vld [vmem:[%s1 + $0x28] sm:$0xf]
      %v262 = vld [vmem:[%s1 + $0x2c] sm:$0xf]
      %v263 = vld [vmem:[%s1 + $0x30] sm:$0xf]
      %v264 = vld [vmem:[%s1 + $0x34] sm:$0xf]
      %v265 = vld [vmem:[%s1 + $0x38] sm:$0xf]
      %v266 = vld [vmem:[%s1 + $0x3c] sm:$0xf]
      %v267 = vld [vmem:[%s1 + $0x40] sm:$0xf]
      %v268 = vld [vmem:[%s1 + $0x44] sm:$0xf]
      %v269 = vld [vmem:[%s1 + $0x48] sm:$0xf]
      %v270 = vld [vmem:[%s1 + $0x4c] sm:$0xf]
      %v271 = vld [vmem:[%s1 + $0x50] sm:$0xf]
      %v272 = vld [vmem:[%s1 + $0x54] sm:$0xf]
      %v273 = vld [vmem:[%s1 + $0x58] sm:$0xf]
      %v274 = vld [vmem:[%s1 + $0x5c] sm:$0xf]
      %v275 = vld [vmem:[%s1 + $0x60] sm:$0xf]
      %v276 = vld [vmem:[%s1 + $0x64] sm:$0xf]
      %v277 = vld [vmem:[%s1 + $0x68] sm:$0xf]
      %v278 = vld [vmem:[%s1 + $0x6c] sm:$0xf]
      %v279 = vld [vmem:[%s1 + $0x70] sm:$0xf]
      %v280 = vld [vmem:[%s1 + $0x74] sm:$0xf]
      %v281 = vld [vmem:[%s1 + $0x78] sm:$0xf]
      %v282 = vld [vmem:[%s1 + $0x7c] sm:$0xf]
      %v283 = vld [vmem:[%s1 + $0x80] sm:$0xf]
      %v284 = vld [vmem:[%s1 + $0x84] sm:$0xf]
      %v285 = vld [vmem:[%s1 + $0x88] sm:$0xf]
      %v286 = vld [vmem:[%s1 + $0x8c] sm:$0xf]
      %v287 = vld [vmem:[%s1 + $0x90] sm:$0xf]
      %v288 = vld [vmem:[%s1 + $0x94] sm:$0xf]
      %v289 = vld [vmem:[%s1 + $0x98] sm:$0xf]
      %v290 = vld [vmem:[%s1 + $0x9c] sm:$0xf]
      %v291 = vld [vmem:[%s1 + $0xa0] sm:$0xf]
      %v292 = vld [vmem:[%s1 + $0xa4] sm:$0xf]
      %v293 = vld [vmem:[%s1 + $0xa8] sm:$0xf]
      %v294 = vld [vmem:[%s1 + $0xac] sm:$0xf]
      %v295 = vld [vmem:[%s1 + $0xb0] sm:$0xf]
      %v296 = vld [vmem:[%s1 + $0xb4] sm:$0xf]
      %v297 = vld [vmem:[%s1 + $0xb8] sm:$0xf]
      %v298 = vld [vmem:[%s1 + $0xbc] sm:$0xf]
      %v299 = vld [vmem:[%s1 + $0xc0] sm:$0xf]
      %v300 = vld [vmem:[%s1 + $0xc4] sm:$0xf]
      %v301 = vld [vmem:[%s1 + $0xc8] sm:$0xf]
      %v302 = vld [vmem:[%s1 + $0xcc] sm:$0xf]
      %v303 = vld [vmem:[%s1 + $0xd0] sm:$0xf]
      %v304 = vld [vmem:[%s1 + $0xd4] sm:$0xf]
      %v305 = vld [vmem:[%s1 + $0xd8] sm:$0xf]
      %v306 = vld [vmem:[%s1 + $0xdc] sm:$0xf]
      %v307 = vld [vmem:[%s1 + $0xe0] sm:$0xf]
      %v308 = vld [vmem:[%s1 + $0xe4] sm:$0xf]
      %v309 = vld [vmem:[%s1 + $0xe8] sm:$0xf]
      %v310 = vld [vmem:[%s1 + $0xec] sm:$0xf]
      %v311 = vld [vmem:[%s1 + $0xf0] sm:$0xf]
      %v312 = vld [vmem:[%s1 + $0xf4] sm:$0xf]
      %v313 = vld [vmem:[%s1 + $0xf8] sm:$0xf]
      %v314 = vld [vmem:[%s1 + $0xfc] sm:$0xf]
      %v315 = vld [vmem:[%s2] sm:$0x1]
      %v316 = vld [vmem:[%s3] sm:$0x7]
      %v317 = vld [vmem:[%s4] sm:$0xff]
      %v318 = vld [vmem:[%s4 + $0x8] sm:$0xff]
      %v319 = vld [vmem:[%s4 + $0x10] sm:$0xff]
      %v320 = vld [vmem:[%s4 + $0x18] sm:$0xff]
      %v321 = vld [vmem:[%s4 + $0x20] sm:$0xff]
      %v322 = vld [vmem:[%s5] sm:$0x1]
      %v323 = vld [vmem:[%s245] sm:$0xff]
      %v324 = vld [vmem:[%s245 + $0x8] sm:$0xff]
      %v325 = vld [vmem:[%s245 + $0x10] sm:$0xff]
      %v326 = vld [vmem:[%s245 + $0x18] sm:$0xff]
      %v327 = vld [vmem:[%s245 + $0x20] sm:$0xff]
      %v328 = vld [vmem:[%s245 + $0x28] sm:$0xff]
      %v329 = vld [vmem:[%s245 + $0x30] sm:$0xff]
      %v330 = vld [vmem:[%s245 + $0x38] sm:$0xff]
      %v331 = vld [vmem:[%s245 + $0x40] sm:$0xff]
      %v332 = vld [vmem:[%s245 + $0x48] sm:$0xff]
      %v333 = vld [vmem:[%s245 + $0x50] sm:$0xff]
      %v334 = vld [vmem:[%s245 + $0x58] sm:$0xff]
      %v335 = vld [vmem:[%s245 + $0x60] sm:$0xff]
      %v336 = vld [vmem:[%s245 + $0x68] sm:$0xff]
      %v337 = vld [vmem:[%s245 + $0x70] sm:$0xff]
      %v338 = vld [vmem:[%s245 + $0x78] sm:$0xff]
      %v339 = vld [vmem:[%s245 + $0x80] sm:$0x1]
      %v340 = vpack.c.bf16 %v324, %v323
      %v341 = vpack.c.bf16 %v326, %v325
      %v342 = vpack.c.bf16 %v328, %v327
      %v343 = vpack.c.bf16 %v330, %v329
      %v344 = vpack.c.bf16 %v332, %v331
      %v345 = vpack.c.bf16 %v334, %v333
      %v346 = vpack.c.bf16 %v336, %v335
      %v347 = vpack.c.bf16 %v338, %v337
      %v348 = vpack.c.bf16 %v339, %v339
      %vm349 = vsmask.f32 7424
      %v351 = vshrl.u32 %v340, 16
      %v353 = vshll.u32 %v340, 16
      %v355 = vrot.slane %v353, 1
      %v356 = vor.u32 %v351, %v355
      %v358 = vshll.u32 %v341, 16
      %v360 = vrot.slane %v358, 1
      %v361 = vsel %vm349, %v356, %v360
      %v362 = vshrl.u32 %v341, 16
      %v364 = vor.u32 %v362, %v360
      %v366 = vshll.u32 %v342, 16
      %v368 = vrot.slane %v366, 1
      %v369 = vsel %vm349, %v364, %v368
      %v370 = vshrl.u32 %v342, 16
      %v372 = vor.u32 %v370, %v368
      %v374 = vshll.u32 %v343, 16
      %v376 = vrot.slane %v374, 1
      %v377 = vsel %vm349, %v372, %v376
      %v378 = vshrl.u32 %v343, 16
      %v380 = vor.u32 %v378, %v376
      %v382 = vshll.u32 %v344, 16
      %v384 = vrot.slane %v382, 1
      %v385 = vsel %vm349, %v380, %v384
      %v386 = vshrl.u32 %v344, 16
      %v388 = vor.u32 %v386, %v384
      %v390 = vshll.u32 %v345, 16
      %v392 = vrot.slane %v390, 1
      %v393 = vsel %vm349, %v388, %v392
      %v394 = vshrl.u32 %v345, 16
      %v396 = vor.u32 %v394, %v392
      %v398 = vshll.u32 %v346, 16
      %v400 = vrot.slane %v398, 1
      %v401 = vsel %vm349, %v396, %v400
      %v402 = vshrl.u32 %v346, 16
      %v404 = vor.u32 %v402, %v400
      %405 = vrot.lane.b32.xlu0 %v361, 18
      %v406 = vpop.permute.xlu0 %405
      %407 = vrot.lane.b32.xlu0 %v369, 18
      %v408 = vpop.permute.xlu0 %407
      %409 = vrot.lane.b32.xlu0 %v377, 18
      %v410 = vpop.permute.xlu0 %409
      %411 = vrot.lane.b32.xlu0 %v385, 18
      %v412 = vpop.permute.xlu0 %411
      %413 = vrot.lane.b32.xlu0 %v393, 18
      %v414 = vpop.permute.xlu0 %413
      %415 = vrot.lane.b32.xlu0 %v401, 18
      %v416 = vpop.permute.xlu0 %415
      %417 = vrot.lane.b32.xlu0 %v404, 18
      %v418 = vpop.permute.xlu0 %417
      %vm426 = vcmask 1046528
      %v427 = vrot.slane %v340, 1
      %v428 = vrot.slane %v341, 1
      %v429 = vsel %vm426, %v427, %v428
      %v430 = vrot.slane %v342, 1
      %v431 = vsel %vm426, %v428, %v430
      %v432 = vrot.slane %v343, 1
      %v433 = vsel %vm426, %v430, %v432
      %v434 = vrot.slane %v344, 1
      %v435 = vsel %vm426, %v432, %v434
      %v436 = vrot.slane %v345, 1
      %v437 = vsel %vm426, %v434, %v436
      %v438 = vrot.slane %v346, 1
      %v439 = vsel %vm426, %v436, %v438
      %440 = vrot.lane.b32.xlu0 %v429, 36
      %v441 = vpop.permute.xlu0 %440
      %442 = vrot.lane.b32.xlu0 %v431, 36
      %v443 = vpop.permute.xlu0 %442
      %444 = vrot.lane.b32.xlu0 %v433, 36
      %v445 = vpop.permute.xlu0 %444
      %446 = vrot.lane.b32.xlu0 %v435, 36
      %v447 = vpop.permute.xlu0 %446
      %448 = vrot.lane.b32.xlu0 %v437, 36
      %v449 = vpop.permute.xlu0 %448
      %450 = vrot.lane.b32.xlu0 %v439, 36
      %v451 = vpop.permute.xlu0 %450
      %452 = vrot.lane.b32.xlu0 %v438, 36
      %v453 = vpop.permute.xlu0 %452
      %vm454 = vsmask.f32 6400
      %v455 = vrot.slane %v351, 1
      %v456 = vrot.slane %v353, 2
      %v457 = vor.u32 %v455, %v456
      %v458 = vrot.slane %v362, 1
      %v459 = vrot.slane %v358, 2
      %v460 = vor.u32 %v458, %v459
      %v461 = vsel %vm454, %v457, %v460
      %v462 = vrot.slane %v370, 1
      %v463 = vrot.slane %v366, 2
      %v464 = vor.u32 %v462, %v463
      %v465 = vsel %vm454, %v460, %v464
      %v466 = vrot.slane %v378, 1
      %v467 = vrot.slane %v374, 2
      %v468 = vor.u32 %v466, %v467
      %v469 = vsel %vm454, %v464, %v468
      %v470 = vrot.slane %v386, 1
      %v471 = vrot.slane %v382, 2
      %v472 = vor.u32 %v470, %v471
      %v473 = vsel %vm454, %v468, %v472
      %v474 = vrot.slane %v394, 1
      %v475 = vrot.slane %v390, 2
      %v476 = vor.u32 %v474, %v475
      %v477 = vsel %vm454, %v472, %v476
      %v478 = vrot.slane %v402, 1
      %v479 = vrot.slane %v398, 2
      %v480 = vor.u32 %v478, %v479
      %v481 = vsel %vm454, %v476, %v480
      %482 = vrot.lane.b32.xlu0 %v461, 54
      %v483 = vpop.permute.xlu0 %482
      %484 = vrot.lane.b32.xlu0 %v465, 54
      %v485 = vpop.permute.xlu0 %484
      %486 = vrot.lane.b32.xlu0 %v469, 54
      %v487 = vpop.permute.xlu0 %486
      %488 = vrot.lane.b32.xlu0 %v473, 54
      %v489 = vpop.permute.xlu0 %488
      %490 = vrot.lane.b32.xlu0 %v477, 54
      %v491 = vpop.permute.xlu0 %490
      %492 = vrot.lane.b32.xlu0 %v481, 54
      %v493 = vpop.permute.xlu0 %492
      %494 = vrot.lane.b32.xlu0 %v480, 54
      %v495 = vpop.permute.xlu0 %494
      %vm496 = vcmask 1045504
      %v497 = vrot.slane %v340, 2
      %v498 = vrot.slane %v341, 2
      %v499 = vsel %vm496, %v497, %v498
      %v500 = vrot.slane %v342, 2
      %v501 = vsel %vm496, %v498, %v500
      %v502 = vrot.slane %v343, 2
      %v503 = vsel %vm496, %v500, %v502
      %v504 = vrot.slane %v344, 2
      %v505 = vsel %vm496, %v502, %v504
      %v506 = vrot.slane %v345, 2
      %v507 = vsel %vm496, %v504, %v506
      %v508 = vrot.slane %v346, 2
      %v509 = vsel %vm496, %v506, %v508
      %510 = vrot.lane.b32.xlu0 %v499, 72
      %v511 = vpop.permute.xlu0 %510
      %512 = vrot.lane.b32.xlu0 %v501, 72
      %v513 = vpop.permute.xlu0 %512
      %514 = vrot.lane.b32.xlu0 %v503, 72
      %v515 = vpop.permute.xlu0 %514
      %516 = vrot.lane.b32.xlu0 %v505, 72
      %v517 = vpop.permute.xlu0 %516
      %518 = vrot.lane.b32.xlu0 %v507, 72
      %v519 = vpop.permute.xlu0 %518
      %520 = vrot.lane.b32.xlu0 %v509, 72
      %v521 = vpop.permute.xlu0 %520
      %522 = vrot.lane.b32.xlu0 %v508, 72
      %v523 = vpop.permute.xlu0 %522
      %vm524 = vsmask.f32 5376
      %v525 = vrot.slane %v351, 2
      %v526 = vrot.slane %v353, 3
      %v527 = vor.u32 %v525, %v526
      %v528 = vrot.slane %v362, 2
      %v529 = vrot.slane %v358, 3
      %v530 = vor.u32 %v528, %v529
      %v531 = vsel %vm524, %v527, %v530
      %v532 = vrot.slane %v370, 2
      %v533 = vrot.slane %v366, 3
      %v534 = vor.u32 %v532, %v533
      %v535 = vsel %vm524, %v530, %v534
      %v536 = vrot.slane %v378, 2
      %v537 = vrot.slane %v374, 3
      %v538 = vor.u32 %v536, %v537
      %v539 = vsel %vm524, %v534, %v538
      %v540 = vrot.slane %v386, 2
      %v541 = vrot.slane %v382, 3
      %v542 = vor.u32 %v540, %v541
      %v543 = vsel %vm524, %v538, %v542
      %v544 = vrot.slane %v394, 2
      %v545 = vrot.slane %v390, 3
      %v546 = vor.u32 %v544, %v545
      %v547 = vsel %vm524, %v542, %v546
      %v548 = vrot.slane %v402, 2
      %v549 = vrot.slane %v398, 3
      %v550 = vor.u32 %v548, %v549
      %v551 = vsel %vm524, %v546, %v550
      %552 = vrot.lane.b32.xlu0 %v531, 90
      %v553 = vpop.permute.xlu0 %552
      %554 = vrot.lane.b32.xlu0 %v535, 90
      %v555 = vpop.permute.xlu0 %554
      %556 = vrot.lane.b32.xlu0 %v539, 90
      %v557 = vpop.permute.xlu0 %556
      %558 = vrot.lane.b32.xlu0 %v543, 90
      %v559 = vpop.permute.xlu0 %558
      %560 = vrot.lane.b32.xlu0 %v547, 90
      %v561 = vpop.permute.xlu0 %560
      %562 = vrot.lane.b32.xlu0 %v551, 90
      %v563 = vpop.permute.xlu0 %562
      %564 = vrot.lane.b32.xlu0 %v550, 90
      %v565 = vpop.permute.xlu0 %564
      %vm566 = vcmask 1044480
      %v567 = vrot.slane %v340, 3
      %v568 = vrot.slane %v341, 3
      %v569 = vsel %vm566, %v567, %v568
      %v570 = vrot.slane %v342, 3
      %v571 = vsel %vm566, %v568, %v570
      %v572 = vrot.slane %v343, 3
      %v573 = vsel %vm566, %v570, %v572
      %v574 = vrot.slane %v344, 3
      %v575 = vsel %vm566, %v572, %v574
      %v576 = vrot.slane %v345, 3
      %v577 = vsel %vm566, %v574, %v576
      %v578 = vrot.slane %v346, 3
      %v579 = vsel %vm566, %v576, %v578
      %580 = vrot.lane.b32.xlu0 %v569, 108
      %v581 = vpop.permute.xlu0 %580
      %582 = vrot.lane.b32.xlu0 %v571, 108
      %v583 = vpop.permute.xlu0 %582
      %584 = vrot.lane.b32.xlu0 %v573, 108
      %v585 = vpop.permute.xlu0 %584
      %586 = vrot.lane.b32.xlu0 %v575, 108
      %v587 = vpop.permute.xlu0 %586
      %588 = vrot.lane.b32.xlu0 %v577, 108
      %v589 = vpop.permute.xlu0 %588
      %590 = vrot.lane.b32.xlu0 %v579, 108
      %v591 = vpop.permute.xlu0 %590
      %592 = vrot.lane.b32.xlu0 %v578, 108
      %v593 = vpop.permute.xlu0 %592
      %vm594 = vsmask.f32 4352
      %v595 = vrot.slane %v351, 3
      %v596 = vrot.slane %v353, 4
      %v597 = vor.u32 %v595, %v596
      %v598 = vrot.slane %v362, 3
      %v599 = vrot.slane %v358, 4
      %v600 = vor.u32 %v598, %v599
      %v601 = vsel %vm594, %v597, %v600
      %v602 = vrot.slane %v370, 3
      %v603 = vrot.slane %v366, 4
      %v604 = vor.u32 %v602, %v603
      %v605 = vsel %vm594, %v600, %v604
      %v606 = vrot.slane %v378, 3
      %v607 = vrot.slane %v374, 4
      %v608 = vor.u32 %v606, %v607
      %v609 = vsel %vm594, %v604, %v608
      %v610 = vrot.slane %v386, 3
      %v611 = vrot.slane %v382, 4
      %v612 = vor.u32 %v610, %v611
      %v613 = vsel %vm594, %v608, %v612
      %v614 = vrot.slane %v394, 3
      %v615 = vrot.slane %v390, 4
      %v616 = vor.u32 %v614, %v615
      %v617 = vsel %vm594, %v612, %v616
      %v618 = vrot.slane %v402, 3
      %v619 = vrot.slane %v398, 4
      %v620 = vor.u32 %v618, %v619
      %v621 = vsel %vm594, %v616, %v620
      %622 = vrot.lane.b32.xlu0 %v601, 126
      %v623 = vpop.permute.xlu0 %622
      %624 = vrot.lane.b32.xlu0 %v605, 126
      %v625 = vpop.permute.xlu0 %624
      %626 = vrot.lane.b32.xlu0 %v609, 126
      %v627 = vpop.permute.xlu0 %626
      %628 = vrot.lane.b32.xlu0 %v613, 126
      %v629 = vpop.permute.xlu0 %628
      %630 = vrot.lane.b32.xlu0 %v617, 126
      %v631 = vpop.permute.xlu0 %630
      %632 = vrot.lane.b32.xlu0 %v621, 126
      %v633 = vpop.permute.xlu0 %632
      %634 = vrot.lane.b32.xlu0 %v620, 126
      %v635 = vpop.permute.xlu0 %634
      %vm637 = vcmask 1043456
      %v638 = vrot.slane %v340, 4
      %v639 = vrot.slane %v341, 4
      %v640 = vsel %vm637, %v638, %v639
      %v641 = vrot.slane %v342, 4
      %v642 = vsel %vm637, %v639, %v641
      %v643 = vrot.slane %v343, 4
      %v644 = vsel %vm637, %v641, %v643
      %v645 = vrot.slane %v344, 4
      %v646 = vsel %vm637, %v643, %v645
      %v647 = vrot.slane %v345, 4
      %v648 = vsel %vm637, %v645, %v647
      %v649 = vrot.slane %v346, 4
      %v650 = vsel %vm637, %v647, %v649
      %v651 = vrot.slane %v347, 4
      %v652 = vsel %vm637, %v649, %v651
      %653 = vrot.lane.b32.xlu0 %v640, 16
      %v654 = vpop.permute.xlu0 %653
      %655 = vrot.lane.b32.xlu0 %v642, 16
      %v656 = vpop.permute.xlu0 %655
      %657 = vrot.lane.b32.xlu0 %v644, 16
      %v658 = vpop.permute.xlu0 %657
      %659 = vrot.lane.b32.xlu0 %v646, 16
      %v660 = vpop.permute.xlu0 %659
      %661 = vrot.lane.b32.xlu0 %v648, 16
      %v662 = vpop.permute.xlu0 %661
      %663 = vrot.lane.b32.xlu0 %v650, 16
      %v664 = vpop.permute.xlu0 %663
      %665 = vrot.lane.b32.xlu0 %v652, 16
      %v666 = vpop.permute.xlu0 %665
      %vm667 = vsmask.f32 3328
      %v668 = vrot.slane %v351, 4
      %v669 = vrot.slane %v353, 5
      %v670 = vor.u32 %v668, %v669
      %v671 = vrot.slane %v362, 4
      %v672 = vrot.slane %v358, 5
      %v673 = vor.u32 %v671, %v672
      %v674 = vsel %vm667, %v670, %v673
      %v675 = vrot.slane %v370, 4
      %v676 = vrot.slane %v366, 5
      %v677 = vor.u32 %v675, %v676
      %v678 = vsel %vm667, %v673, %v677
      %v679 = vrot.slane %v378, 4
      %v680 = vrot.slane %v374, 5
      %v681 = vor.u32 %v679, %v680
      %v682 = vsel %vm667, %v677, %v681
      %v683 = vrot.slane %v386, 4
      %v684 = vrot.slane %v382, 5
      %v685 = vor.u32 %v683, %v684
      %v686 = vsel %vm667, %v681, %v685
      %v687 = vrot.slane %v394, 4
      %v688 = vrot.slane %v390, 5
      %v689 = vor.u32 %v687, %v688
      %v690 = vsel %vm667, %v685, %v689
      %v691 = vrot.slane %v402, 4
      %v692 = vrot.slane %v398, 5
      %v693 = vor.u32 %v691, %v692
      %v694 = vsel %vm667, %v689, %v693
      %v696 = vshrl.u32 %v347, 16
      %v698 = vrot.slane %v696, 4
      %v699 = vshll.u32 %v347, 16
      %v701 = vrot.slane %v699, 5
      %v702 = vor.u32 %v698, %v701
      %v703 = vsel %vm667, %v693, %v702
      %704 = vrot.lane.b32.xlu0 %v674, 34
      %v705 = vpop.permute.xlu0 %704
      %706 = vrot.lane.b32.xlu0 %v678, 34
      %v707 = vpop.permute.xlu0 %706
      %708 = vrot.lane.b32.xlu0 %v682, 34
      %v709 = vpop.permute.xlu0 %708
      %710 = vrot.lane.b32.xlu0 %v686, 34
      %v711 = vpop.permute.xlu0 %710
      %712 = vrot.lane.b32.xlu0 %v690, 34
      %v713 = vpop.permute.xlu0 %712
      %714 = vrot.lane.b32.xlu0 %v694, 34
      %v715 = vpop.permute.xlu0 %714
      %716 = vrot.lane.b32.xlu0 %v703, 34
      %v717 = vpop.permute.xlu0 %716
      %vm718 = vcmask 1042432
      %v719 = vrot.slane %v340, 5
      %v720 = vrot.slane %v341, 5
      %v721 = vsel %vm718, %v719, %v720
      %v722 = vrot.slane %v342, 5
      %v723 = vsel %vm718, %v720, %v722
      %v724 = vrot.slane %v343, 5
      %v725 = vsel %vm718, %v722, %v724
      %v726 = vrot.slane %v344, 5
      %v727 = vsel %vm718, %v724, %v726
      %v728 = vrot.slane %v345, 5
      %v729 = vsel %vm718, %v726, %v728
      %v730 = vrot.slane %v346, 5
      %v731 = vsel %vm718, %v728, %v730
      %v732 = vrot.slane %v347, 5
      %v733 = vsel %vm718, %v730, %v732
      %734 = vrot.lane.b32.xlu0 %v721, 52
      %v735 = vpop.permute.xlu0 %734
      %736 = vrot.lane.b32.xlu0 %v723, 52
      %v737 = vpop.permute.xlu0 %736
      %738 = vrot.lane.b32.xlu0 %v725, 52
      %v739 = vpop.permute.xlu0 %738
      %740 = vrot.lane.b32.xlu0 %v727, 52
      %v741 = vpop.permute.xlu0 %740
      %742 = vrot.lane.b32.xlu0 %v729, 52
      %v743 = vpop.permute.xlu0 %742
      %744 = vrot.lane.b32.xlu0 %v731, 52
      %v745 = vpop.permute.xlu0 %744
      %746 = vrot.lane.b32.xlu0 %v733, 52
      %v747 = vpop.permute.xlu0 %746
      %vm748 = vsmask.f32 2304
      %v749 = vrot.slane %v351, 5
      %v750 = vrot.slane %v353, 6
      %v751 = vor.u32 %v749, %v750
      %v752 = vrot.slane %v362, 5
      %v753 = vrot.slane %v358, 6
      %v754 = vor.u32 %v752, %v753
      %v755 = vsel %vm748, %v751, %v754
      %v756 = vrot.slane %v370, 5
      %v757 = vrot.slane %v366, 6
      %v758 = vor.u32 %v756, %v757
      %v759 = vsel %vm748, %v754, %v758
      %v760 = vrot.slane %v378, 5
      %v761 = vrot.slane %v374, 6
      %v762 = vor.u32 %v760, %v761
      %v763 = vsel %vm748, %v758, %v762
      %v764 = vrot.slane %v386, 5
      %v765 = vrot.slane %v382, 6
      %v766 = vor.u32 %v764, %v765
      %v767 = vsel %vm748, %v762, %v766
      %v768 = vrot.slane %v394, 5
      %v769 = vrot.slane %v390, 6
      %v770 = vor.u32 %v768, %v769
      %v771 = vsel %vm748, %v766, %v770
      %v772 = vrot.slane %v402, 5
      %v773 = vrot.slane %v398, 6
      %v774 = vor.u32 %v772, %v773
      %v775 = vsel %vm748, %v770, %v774
      %v776 = vrot.slane %v696, 5
      %v777 = vrot.slane %v699, 6
      %v778 = vor.u32 %v776, %v777
      %v779 = vsel %vm748, %v774, %v778
      %780 = vrot.lane.b32.xlu0 %v755, 70
      %v781 = vpop.permute.xlu0 %780
      %782 = vrot.lane.b32.xlu0 %v759, 70
      %v783 = vpop.permute.xlu0 %782
      %784 = vrot.lane.b32.xlu0 %v763, 70
      %v785 = vpop.permute.xlu0 %784
      %786 = vrot.lane.b32.xlu0 %v767, 70
      %v787 = vpop.permute.xlu0 %786
      %788 = vrot.lane.b32.xlu0 %v771, 70
      %v789 = vpop.permute.xlu0 %788
      %790 = vrot.lane.b32.xlu0 %v775, 70
      %v791 = vpop.permute.xlu0 %790
      %792 = vrot.lane.b32.xlu0 %v779, 70
      %v793 = vpop.permute.xlu0 %792
      %vm794 = vcmask 1041408
      %v795 = vrot.slane %v340, 6
      %v796 = vrot.slane %v341, 6
      %v797 = vsel %vm794, %v795, %v796
      %v798 = vrot.slane %v342, 6
      %v799 = vsel %vm794, %v796, %v798
      %v800 = vrot.slane %v343, 6
      %v801 = vsel %vm794, %v798, %v800
      %v802 = vrot.slane %v344, 6
      %v803 = vsel %vm794, %v800, %v802
      %v804 = vrot.slane %v345, 6
      %v805 = vsel %vm794, %v802, %v804
      %v806 = vrot.slane %v346, 6
      %v807 = vsel %vm794, %v804, %v806
      %v808 = vrot.slane %v347, 6
      %v809 = vsel %vm794, %v806, %v808
      %810 = vrot.lane.b32.xlu0 %v797, 88
      %v811 = vpop.permute.xlu0 %810
      %812 = vrot.lane.b32.xlu0 %v799, 88
      %v813 = vpop.permute.xlu0 %812
      %814 = vrot.lane.b32.xlu0 %v801, 88
      %v815 = vpop.permute.xlu0 %814
      %816 = vrot.lane.b32.xlu0 %v803, 88
      %v817 = vpop.permute.xlu0 %816
      %818 = vrot.lane.b32.xlu0 %v805, 88
      %v819 = vpop.permute.xlu0 %818
      %820 = vrot.lane.b32.xlu0 %v807, 88
      %v821 = vpop.permute.xlu0 %820
      %822 = vrot.lane.b32.xlu0 %v809, 88
      %v823 = vpop.permute.xlu0 %822
      %vm824 = vsmask.f32 1280
      %v825 = vrot.slane %v351, 6
      %v826 = vrot.slane %v353, 7
      %v827 = vor.u32 %v825, %v826
      %v828 = vrot.slane %v362, 6
      %v829 = vrot.slane %v358, 7
      %v830 = vor.u32 %v828, %v829
      %v831 = vsel %vm824, %v827, %v830
      %v832 = vrot.slane %v370, 6
      %v833 = vrot.slane %v366, 7
      %v834 = vor.u32 %v832, %v833
      %v835 = vsel %vm824, %v830, %v834
      %v836 = vrot.slane %v378, 6
      %v837 = vrot.slane %v374, 7
      %v838 = vor.u32 %v836, %v837
      %v839 = vsel %vm824, %v834, %v838
      %v840 = vrot.slane %v386, 6
      %v841 = vrot.slane %v382, 7
      %v842 = vor.u32 %v840, %v841
      %v843 = vsel %vm824, %v838, %v842
      %v844 = vrot.slane %v394, 6
      %v845 = vrot.slane %v390, 7
      %v846 = vor.u32 %v844, %v845
      %v847 = vsel %vm824, %v842, %v846
      %v848 = vrot.slane %v402, 6
      %v849 = vrot.slane %v398, 7
      %v850 = vor.u32 %v848, %v849
      %v851 = vsel %vm824, %v846, %v850
      %v852 = vrot.slane %v696, 6
      %v853 = vrot.slane %v699, 7
      %v854 = vor.u32 %v852, %v853
      %v855 = vsel %vm824, %v850, %v854
      %856 = vrot.lane.b32.xlu0 %v831, 106
      %v857 = vpop.permute.xlu0 %856
      %858 = vrot.lane.b32.xlu0 %v835, 106
      %v859 = vpop.permute.xlu0 %858
      %860 = vrot.lane.b32.xlu0 %v839, 106
      %v861 = vpop.permute.xlu0 %860
      %862 = vrot.lane.b32.xlu0 %v843, 106
      %v863 = vpop.permute.xlu0 %862
      %864 = vrot.lane.b32.xlu0 %v847, 106
      %v865 = vpop.permute.xlu0 %864
      %866 = vrot.lane.b32.xlu0 %v851, 106
      %v867 = vpop.permute.xlu0 %866
      %868 = vrot.lane.b32.xlu0 %v855, 106
      %v869 = vpop.permute.xlu0 %868
      %vm870 = vcmask 1040384
      %v871 = vrot.slane %v340, 7
      %v872 = vrot.slane %v341, 7
      %v873 = vsel %vm870, %v871, %v872
      %v874 = vrot.slane %v342, 7
      %v875 = vsel %vm870, %v872, %v874
      %v876 = vrot.slane %v343, 7
      %v877 = vsel %vm870, %v874, %v876
      %v878 = vrot.slane %v344, 7
      %v879 = vsel %vm870, %v876, %v878
      %v880 = vrot.slane %v345, 7
      %v881 = vsel %vm870, %v878, %v880
      %v882 = vrot.slane %v346, 7
      %v883 = vsel %vm870, %v880, %v882
      %v884 = vrot.slane %v347, 7
      %v885 = vsel %vm870, %v882, %v884
      %886 = vrot.lane.b32.xlu0 %v873, 124
      %v887 = vpop.permute.xlu0 %886
      %888 = vrot.lane.b32.xlu0 %v875, 124
      %v889 = vpop.permute.xlu0 %888
      %890 = vrot.lane.b32.xlu0 %v877, 124
      %v891 = vpop.permute.xlu0 %890
      %892 = vrot.lane.b32.xlu0 %v879, 124
      %v893 = vpop.permute.xlu0 %892
      %894 = vrot.lane.b32.xlu0 %v881, 124
      %v895 = vpop.permute.xlu0 %894
      %896 = vrot.lane.b32.xlu0 %v883, 124
      %v897 = vpop.permute.xlu0 %896
      %898 = vrot.lane.b32.xlu0 %v885, 124
      %v899 = vpop.permute.xlu0 %898
      %vm900 = vsmask.f32 256
      %v901 = vrot.slane %v351, 7
      %v902 = vrot.slane %v362, 7
      %v903 = vor.u32 %v902, %v358
      %v904 = vsel %vm900, %v901, %v903
      %v905 = vrot.slane %v370, 7
      %v906 = vor.u32 %v905, %v366
      %v907 = vsel %vm900, %v902, %v906
      %v908 = vrot.slane %v378, 7
      %v909 = vor.u32 %v908, %v374
      %v910 = vsel %vm900, %v905, %v909
      %v911 = vrot.slane %v386, 7
      %v912 = vor.u32 %v911, %v382
      %v913 = vsel %vm900, %v908, %v912
      %v914 = vrot.slane %v394, 7
      %v915 = vor.u32 %v914, %v390
      %v916 = vsel %vm900, %v911, %v915
      %v917 = vrot.slane %v402, 7
      %v918 = vor.u32 %v917, %v398
      %v919 = vsel %vm900, %v914, %v918
      %v920 = vrot.slane %v696, 7
      %v921 = vor.u32 %v920, %v699
      %v922 = vsel %vm900, %v917, %v921
      %923 = vrot.lane.b32.xlu0 %v904, 14
      %v924 = vpop.permute.xlu0 %923
      %925 = vrot.lane.b32.xlu0 %v907, 14
      %v926 = vpop.permute.xlu0 %925
      %927 = vrot.lane.b32.xlu0 %v910, 14
      %v928 = vpop.permute.xlu0 %927
      %929 = vrot.lane.b32.xlu0 %v913, 14
      %v930 = vpop.permute.xlu0 %929
      %931 = vrot.lane.b32.xlu0 %v916, 14
      %v932 = vpop.permute.xlu0 %931
      %933 = vrot.lane.b32.xlu0 %v919, 14
      %v934 = vpop.permute.xlu0 %933
      %935 = vrot.lane.b32.xlu0 %v922, 14
      %v936 = vpop.permute.xlu0 %935
      %vm937 = vcmask 146432
      %v939 = vsel %vm937, %v340, %v406
      %v941 = vsel %vm937, %v341, %v408
      %v943 = vsel %vm937, %v342, %v410
      %v945 = vsel %vm937, %v343, %v412
      %v947 = vsel %vm937, %v344, %v414
      %v949 = vsel %vm937, %v345, %v416
      %v951 = vsel %vm937, %v346, %v418
      %vm952 = vcmask 293888
      %v954 = vsel %vm952, %v939, %v441
      %v956 = vsel %vm952, %v941, %v443
      %v958 = vsel %vm952, %v943, %v445
      %v960 = vsel %vm952, %v945, %v447
      %v962 = vsel %vm952, %v947, %v449
      %v964 = vsel %vm952, %v949, %v451
      %v966 = vsel %vm952, %v951, %v453
      %vm967 = vcmask 441344
      %v969 = vsel %vm967, %v954, %v483
      %v971 = vsel %vm967, %v956, %v485
      %v973 = vsel %vm967, %v958, %v487
      %v975 = vsel %vm967, %v960, %v489
      %v977 = vsel %vm967, %v962, %v491
      %v979 = vsel %vm967, %v964, %v493
      %v981 = vsel %vm967, %v966, %v495
      %vm982 = vcmask 588800
      %v984 = vsel %vm982, %v969, %v511
      %v986 = vsel %vm982, %v971, %v513
      %v988 = vsel %vm982, %v973, %v515
      %v990 = vsel %vm982, %v975, %v517
      %v992 = vsel %vm982, %v977, %v519
      %v994 = vsel %vm982, %v979, %v521
      %v996 = vsel %vm982, %v981, %v523
      %vm997 = vcmask 736256
      %v999 = vsel %vm997, %v984, %v553
      %v1001 = vsel %vm997, %v986, %v555
      %v1003 = vsel %vm997, %v988, %v557
      %v1005 = vsel %vm997, %v990, %v559
      %v1007 = vsel %vm997, %v992, %v561
      %v1009 = vsel %vm997, %v994, %v563
      %v1011 = vsel %vm997, %v996, %v565
      %vm1012 = vcmask 883712
      %v1014 = vsel %vm1012, %v999, %v581
      %v1016 = vsel %vm1012, %v1001, %v583
      %v1018 = vsel %vm1012, %v1003, %v585
      %v1020 = vsel %vm1012, %v1005, %v587
      %v1022 = vsel %vm1012, %v1007, %v589
      %v1024 = vsel %vm1012, %v1009, %v591
      %v1026 = vsel %vm1012, %v1011, %v593
      %vm1027 = vcmask 1031168
      %v1029 = vsel %vm1027, %v1014, %v623
      %v1032 = vsel %vm1027, %v1016, %v625
      %v1035 = vsel %vm1027, %v1018, %v627
      %v1038 = vsel %vm1027, %v1020, %v629
      %v1041 = vsel %vm1027, %v1022, %v631
      %v1044 = vsel %vm1027, %v1024, %v633
      %v1047 = vsel %vm1027, %v1026, %v635
      %vm1049 = vcmask 130048
      %v1051 = vsel %vm1049, %v623, %v654
      %v1053 = vsel %vm1049, %v625, %v656
      %v1055 = vsel %vm1049, %v627, %v658
      %v1057 = vsel %vm1049, %v629, %v660
      %v1059 = vsel %vm1049, %v631, %v662
      %v1061 = vsel %vm1049, %v633, %v664
      %v1063 = vsel %vm1049, %v635, %v666
      %vm1064 = vcmask 277504
      %v1066 = vsel %vm1064, %v1051, %v705
      %v1068 = vsel %vm1064, %v1053, %v707
      %v1070 = vsel %vm1064, %v1055, %v709
      %v1072 = vsel %vm1064, %v1057, %v711
      %v1074 = vsel %vm1064, %v1059, %v713
      %v1076 = vsel %vm1064, %v1061, %v715
      %v1078 = vsel %vm1064, %v1063, %v717
      %vm1079 = vcmask 424960
      %v1081 = vsel %vm1079, %v1066, %v735
      %v1083 = vsel %vm1079, %v1068, %v737
      %v1085 = vsel %vm1079, %v1070, %v739
      %v1087 = vsel %vm1079, %v1072, %v741
      %v1089 = vsel %vm1079, %v1074, %v743
      %v1091 = vsel %vm1079, %v1076, %v745
      %v1093 = vsel %vm1079, %v1078, %v747
      %vm1094 = vcmask 572416
      %v1096 = vsel %vm1094, %v1081, %v781
      %v1098 = vsel %vm1094, %v1083, %v783
      %v1100 = vsel %vm1094, %v1085, %v785
      %v1102 = vsel %vm1094, %v1087, %v787
      %v1104 = vsel %vm1094, %v1089, %v789
      %v1106 = vsel %vm1094, %v1091, %v791
      %v1108 = vsel %vm1094, %v1093, %v793
      %vm1109 = vcmask 719872
      %v1111 = vsel %vm1109, %v1096, %v811
      %v1113 = vsel %vm1109, %v1098, %v813
      %v1115 = vsel %vm1109, %v1100, %v815
      %v1117 = vsel %vm1109, %v1102, %v817
      %v1119 = vsel %vm1109, %v1104, %v819
      %v1121 = vsel %vm1109, %v1106, %v821
      %v1123 = vsel %vm1109, %v1108, %v823
      %vm1124 = vcmask 867328
      %v1126 = vsel %vm1124, %v1111, %v857
      %v1128 = vsel %vm1124, %v1113, %v859
      %v1130 = vsel %vm1124, %v1115, %v861
      %v1132 = vsel %vm1124, %v1117, %v863
      %v1134 = vsel %vm1124, %v1119, %v865
      %v1136 = vsel %vm1124, %v1121, %v867
      %v1138 = vsel %vm1124, %v1123, %v869
      %vm1139 = vcmask 1014784
      %v1141 = vsel %vm1139, %v1126, %v887
      %v1144 = vsel %vm1139, %v1128, %v889
      %v1147 = vsel %vm1139, %v1130, %v891
      %v1150 = vsel %vm1139, %v1132, %v893
      %v1153 = vsel %vm1139, %v1134, %v895
      %v1156 = vsel %vm1139, %v1136, %v897
      %v1159 = vsel %vm1139, %v1138, %v899
      %vm1161 = vcmask 113664
      %v1163 = vsel %vm1161, %v887, %v924
      %v1165 = vsel %vm1161, %v889, %v926
      %v1167 = vsel %vm1161, %v891, %v928
      %v1169 = vsel %vm1161, %v893, %v930
      %v1171 = vsel %vm1161, %v895, %v932
      %v1173 = vsel %vm1161, %v897, %v934
      %v1175 = vsel %vm1161, %v899, %v936
      %v1176 = vrot.slane %v699, 1
      %v1177 = vsel %vm349, %v404, %v1176
      %v1178 = vor.u32 %v696, %v1176
      %1179 = vrot.lane.b32.xlu0 %v1177, 18
      %v1180 = vpop.permute.xlu0 %1179
      %1181 = vrot.lane.b32.xlu0 %v1178, 18
      %v1182 = vpop.permute.xlu0 %1181
      %v1183 = vrot.slane %v347, 1
      %v1184 = vsel %vm426, %v438, %v1183
      %1185 = vrot.lane.b32.xlu0 %v1184, 36
      %v1186 = vpop.permute.xlu0 %1185
      %1187 = vrot.lane.b32.xlu0 %v1183, 36
      %v1188 = vpop.permute.xlu0 %1187
      %v1189 = vrot.slane %v696, 1
      %v1190 = vrot.slane %v699, 2
      %v1191 = vor.u32 %v1189, %v1190
      %v1192 = vsel %vm454, %v480, %v1191
      %1193 = vrot.lane.b32.xlu0 %v1192, 54
      %v1194 = vpop.permute.xlu0 %1193
      %1195 = vrot.lane.b32.xlu0 %v1191, 54
      %v1196 = vpop.permute.xlu0 %1195
      %v1197 = vrot.slane %v347, 2
      %v1198 = vsel %vm496, %v508, %v1197
      %1199 = vrot.lane.b32.xlu0 %v1198, 72
      %v1200 = vpop.permute.xlu0 %1199
      %1201 = vrot.lane.b32.xlu0 %v1197, 72
      %v1202 = vpop.permute.xlu0 %1201
      %v1203 = vrot.slane %v696, 2
      %v1204 = vrot.slane %v699, 3
      %v1205 = vor.u32 %v1203, %v1204
      %v1206 = vsel %vm524, %v550, %v1205
      %1207 = vrot.lane.b32.xlu0 %v1206, 90
      %v1208 = vpop.permute.xlu0 %1207
      %1209 = vrot.lane.b32.xlu0 %v1205, 90
      %v1210 = vpop.permute.xlu0 %1209
      %v1211 = vrot.slane %v347, 3
      %v1212 = vsel %vm566, %v578, %v1211
      %1213 = vrot.lane.b32.xlu0 %v1212, 108
      %v1214 = vpop.permute.xlu0 %1213
      %1215 = vrot.lane.b32.xlu0 %v1211, 108
      %v1216 = vpop.permute.xlu0 %1215
      %v1217 = vrot.slane %v696, 3
      %v1218 = vrot.slane %v699, 4
      %v1219 = vor.u32 %v1217, %v1218
      %v1220 = vsel %vm594, %v620, %v1219
      %1221 = vrot.lane.b32.xlu0 %v1220, 126
      %v1222 = vpop.permute.xlu0 %1221
      %1223 = vrot.lane.b32.xlu0 %v1219, 126
      %v1224 = vpop.permute.xlu0 %1223
      %v1226 = vrot.slane %v348, 4
      %v1227 = vsel %vm637, %v651, %v1226
      %1228 = vrot.lane.b32.xlu0 %v1227, 16
      %v1229 = vpop.permute.xlu0 %1228
      %v1231 = vsel %vm937, %v346, %v1180
      %v1233 = vsel %vm937, %v347, %v1182
      %v1235 = vsel %vm952, %v1231, %v1186
      %v1237 = vsel %vm952, %v1233, %v1188
      %v1239 = vsel %vm967, %v1235, %v1194
      %v1241 = vsel %vm967, %v1237, %v1196
      %v1243 = vsel %vm982, %v1239, %v1200
      %v1245 = vsel %vm982, %v1241, %v1202
      %v1247 = vsel %vm997, %v1243, %v1208
      %v1249 = vsel %vm997, %v1245, %v1210
      %v1251 = vsel %vm1012, %v1247, %v1214
      %v1253 = vsel %vm1012, %v1249, %v1216
      %v1255 = vsel %vm1027, %v1251, %v1222
      %v1257 = vsel %vm1027, %v1253, %v1224
      %v1258 = vsel %vm1049, %v1222, %v666
      %v1260 = vsel %vm1049, %v1224, %v1229
      %v1262 = vsel %vm1064, %v1053, 0
      %v1263 = vsel %vm1064, %v1055, 0
      %v1264 = vsel %vm1064, %v1057, 0
      %v1265 = vsel %vm1064, %v1059, 0
      %v1266 = vsel %vm1064, %v1061, 0
      %v1267 = vsel %vm1064, %v1258, 0
      %v1268 = vsel %vm1064, %v1260, 0
      %1283 = vrot.lane.b32.xlu0 %v1032, 32
      %v1284 = vpop.permute.xlu0 %1283
      %1285 = vrot.lane.b32.xlu0 %v1262, 32
      %v1286 = vpop.permute.xlu0 %1285
      %1287 = vrot.lane.b32.xlu0 %v1035, 32
      %v1288 = vpop.permute.xlu0 %1287
      %1289 = vrot.lane.b32.xlu0 %v1263, 32
      %v1290 = vpop.permute.xlu0 %1289
      %1291 = vrot.lane.b32.xlu0 %v1038, 32
      %v1292 = vpop.permute.xlu0 %1291
      %1293 = vrot.lane.b32.xlu0 %v1264, 32
      %v1294 = vpop.permute.xlu0 %1293
      %1295 = vrot.lane.b32.xlu0 %v1041, 32
      %v1296 = vpop.permute.xlu0 %1295
      %1297 = vrot.lane.b32.xlu0 %v1265, 32
      %v1298 = vpop.permute.xlu0 %1297
      %1299 = vrot.lane.b32.xlu0 %v1044, 32
      %v1300 = vpop.permute.xlu0 %1299
      %1301 = vrot.lane.b32.xlu0 %v1266, 32
      %v1302 = vpop.permute.xlu0 %1301
      %1303 = vrot.lane.b32.xlu0 %v1255, 32
      %v1304 = vpop.permute.xlu0 %1303
      %1305 = vrot.lane.b32.xlu0 %v1267, 32
      %v1306 = vpop.permute.xlu0 %1305
      %1307 = vrot.lane.b32.xlu0 %v1257, 32
      %v1308 = vpop.permute.xlu0 %1307
      %1309 = vrot.lane.b32.xlu0 %v1268, 32
      %v1310 = vpop.permute.xlu0 %1309
      %vm1311 = vcmask 261120
      %v1312 = vsel %vm1311, %v1284, %v1286
      %v1313 = vsel %vm1311, %v1288, %v1290
      %v1314 = vsel %vm1311, %v1292, %v1294
      %v1315 = vsel %vm1311, %v1296, %v1298
      %v1316 = vsel %vm1311, %v1300, %v1302
      %v1317 = vsel %vm1311, %v1304, %v1306
      %v1318 = vsel %vm1311, %v1308, %v1310
      %vm1326 = vcmask 261120
      %v1328 = vsel %vm1326, %v1163, %v1284
      %v1331 = vsel %vm1326, %v1165, %v1288
      %v1334 = vsel %vm1326, %v1167, %v1292
      %v1337 = vsel %vm1326, %v1169, %v1296
      %v1340 = vsel %vm1326, %v1171, %v1300
      %v1343 = vsel %vm1326, %v1173, %v1304
      %v1346 = vsel %vm1326, %v1175, %v1308
      %v1349 = vlaneseq
      %v1350 = vshrl.u32 %v1349, 7
      %v1351 = vsub.s32 0, %v1350
      %v1352 = vrot.slane %v315, %v1351
      %v1418 = vunpack.c.l.b16 %v251
      %v1419 = vunpack.c.l.b16 %v252
      %v1420 = vunpack.c.l.b16 %v253
      %v1421 = vunpack.c.l.b16 %v254
      %v1422 = vunpack.c.l.b16 %v255
      %v1423 = vunpack.c.l.b16 %v256
      %v1424 = vunpack.c.l.b16 %v257
      %v1425 = vunpack.c.l.b16 %v258
      %v1426 = vunpack.c.l.b16 %v259
      %v1427 = vunpack.c.l.b16 %v260
      %v1428 = vunpack.c.l.b16 %v261
      %v1429 = vunpack.c.l.b16 %v262
      %v1430 = vunpack.c.l.b16 %v263
      %v1431 = vunpack.c.l.b16 %v264
      %v1432 = vunpack.c.l.b16 %v265
      %v1433 = vunpack.c.l.b16 %v266
      %v1434 = vunpack.c.l.b16 %v267
      %v1435 = vunpack.c.l.b16 %v268
      %v1436 = vunpack.c.l.b16 %v269
      %v1437 = vunpack.c.l.b16 %v270
      %v1438 = vunpack.c.l.b16 %v271
      %v1439 = vunpack.c.l.b16 %v272
      %v1440 = vunpack.c.l.b16 %v273
      %v1441 = vunpack.c.l.b16 %v274
      %v1442 = vunpack.c.l.b16 %v275
      %v1443 = vunpack.c.l.b16 %v276
      %v1444 = vunpack.c.l.b16 %v277
      %v1445 = vunpack.c.l.b16 %v278
      %v1446 = vunpack.c.l.b16 %v279
      %v1447 = vunpack.c.l.b16 %v280
      %v1448 = vunpack.c.l.b16 %v281
      %v1449 = vunpack.c.l.b16 %v282
      %v1450 = vunpack.c.l.b16 %v283
      %v1451 = vunpack.c.l.b16 %v284
      %v1452 = vunpack.c.l.b16 %v285
      %v1453 = vunpack.c.l.b16 %v286
      %v1454 = vunpack.c.l.b16 %v287
      %v1455 = vunpack.c.l.b16 %v288
      %v1456 = vunpack.c.l.b16 %v289
      %v1457 = vunpack.c.l.b16 %v290
      %v1458 = vunpack.c.l.b16 %v291
      %v1459 = vunpack.c.l.b16 %v292
      %v1460 = vunpack.c.l.b16 %v293
      %v1461 = vunpack.c.l.b16 %v294
      %v1462 = vunpack.c.l.b16 %v295
      %v1463 = vunpack.c.l.b16 %v296
      %v1464 = vunpack.c.l.b16 %v297
      %v1465 = vunpack.c.l.b16 %v298
      %v1466 = vunpack.c.l.b16 %v299
      %v1467 = vunpack.c.l.b16 %v300
      %v1468 = vunpack.c.l.b16 %v301
      %v1469 = vunpack.c.l.b16 %v302
      %v1470 = vunpack.c.l.b16 %v303
      %v1471 = vunpack.c.l.b16 %v304
      %v1472 = vunpack.c.l.b16 %v305
      %v1473 = vunpack.c.l.b16 %v306
      %v1474 = vunpack.c.l.b16 %v307
      %v1475 = vunpack.c.l.b16 %v308
      %v1476 = vunpack.c.l.b16 %v309
      %v1477 = vunpack.c.l.b16 %v310
      %v1478 = vunpack.c.l.b16 %v311
      %v1479 = vunpack.c.l.b16 %v312
      %v1480 = vunpack.c.l.b16 %v313
      %v1481 = vunpack.c.l.b16 %v314
      %v1482 = vpack.c.b16 %v1419, %v1418
      %v1483 = vpack.c.b16 %v1421, %v1420
      %v1484 = vpack.c.b16 %v1423, %v1422
      %v1485 = vpack.c.b16 %v1425, %v1424
      %v1486 = vpack.c.b16 %v1427, %v1426
      %v1487 = vpack.c.b16 %v1429, %v1428
      %v1488 = vpack.c.b16 %v1431, %v1430
      %v1489 = vpack.c.b16 %v1433, %v1432
      %v1490 = vpack.c.b16 %v1435, %v1434
      %v1491 = vpack.c.b16 %v1437, %v1436
      %v1492 = vpack.c.b16 %v1439, %v1438
      %v1493 = vpack.c.b16 %v1441, %v1440
      %v1494 = vpack.c.b16 %v1443, %v1442
      %v1495 = vpack.c.b16 %v1445, %v1444
      %v1496 = vpack.c.b16 %v1447, %v1446
      %v1497 = vpack.c.b16 %v1449, %v1448
      %v1498 = vpack.c.b16 %v1451, %v1450
      %v1499 = vpack.c.b16 %v1453, %v1452
      %v1500 = vpack.c.b16 %v1455, %v1454
      %v1501 = vpack.c.b16 %v1457, %v1456
      %v1502 = vpack.c.b16 %v1459, %v1458
      %v1503 = vpack.c.b16 %v1461, %v1460
      %v1504 = vpack.c.b16 %v1463, %v1462
      %v1505 = vpack.c.b16 %v1465, %v1464
      %v1506 = vpack.c.b16 %v1467, %v1466
      %v1507 = vpack.c.b16 %v1469, %v1468
      %v1508 = vpack.c.b16 %v1471, %v1470
      %v1509 = vpack.c.b16 %v1473, %v1472
      %v1510 = vpack.c.b16 %v1475, %v1474
      %v1511 = vpack.c.b16 %v1477, %v1476
      %v1512 = vpack.c.b16 %v1479, %v1478
      %v1513 = vpack.c.b16 %v1481, %v1480
      %1546 = vmatprep.subr.bf16.mxu0 0
      %1547 = vmatpush1.bf16.msra.mxu0 %v1482
      %1548 = vmatprep.subr.bf16.mxu0 0
      %1549 = vmatpush1.bf16.msra.mxu0 %v1483
      %1550 = vmatprep.subr.bf16.mxu0 0
      %1551 = vmatpush1.bf16.msra.mxu0 %v1484
      %1552 = vmatprep.subr.bf16.mxu0 0
      %1553 = vmatpush1.bf16.msra.mxu0 %v1485
      %1554 = vmatprep.subr.bf16.mxu0 0
      %1555 = vmatpush1.bf16.msra.mxu0 %v1486
      %1556 = vmatprep.subr.bf16.mxu0 0
      %1557 = vmatpush1.bf16.msra.mxu0 %v1487
      %1558 = vmatprep.subr.bf16.mxu0 0
      %1559 = vmatpush1.bf16.msra.mxu0 %v1488
      %1560 = vmatprep.subr.bf16.mxu0 0
      %1561 = vmatpush1.bf16.msra.mxu0 %v1489
      %1562 = vmatprep.subr.bf16.mxu0 0
      %1563 = vmatpush1.bf16.msra.mxu0 %v1490
      %1564 = vmatprep.subr.bf16.mxu0 0
      %1565 = vmatpush1.bf16.msra.mxu0 %v1491
      %1566 = vmatprep.subr.bf16.mxu0 0
      %1567 = vmatpush1.bf16.msra.mxu0 %v1492
      %1568 = vmatprep.subr.bf16.mxu0 0
      %1569 = vmatpush1.bf16.msra.mxu0 %v1493
      %1570 = vmatprep.subr.bf16.mxu0 0
      %1571 = vmatpush1.bf16.msra.mxu0 %v1494
      %1572 = vmatprep.subr.bf16.mxu0 0
      %1573 = vmatpush1.bf16.msra.mxu0 %v1495
      %1574 = vmatprep.subr.bf16.mxu0 0
      %1575 = vmatpush1.bf16.msra.mxu0 %v1496
      %1576 = vmatprep.subr.bf16.mxu0 0
      %1577 = vmatpush1.bf16.msra.mxu0 %v1497
      %1578 = vmatprep.mubr.bf16.mxu0 %v1141
      %1579 = vmatmul.mubr.bf16.gmra.mrb[0].mxu0 %v1029
      %v1580 = vpop.f32.mrb[0].mxu0
      %v1581 = vadd.f32 %v1352, %v1580
      %v1582 = vpop.f32.mrb[0].mxu0
      %v1583 = vpop.f32.mrb[0].mxu0
      %v1584 = vadd.f32 %v1352, %v1583
      %v1585 = vpop.f32.mrb[0].mxu0
      %1586 = vmatprep.mubr.bf16.mxu0 %v1144
      %1587 = vmatmul.mubr.bf16.gmra.mrb[0].mxu0 %v1032
      %v1588 = vpop.f32.mrb[0].mxu0
      %v1589 = vadd.f32 %v1352, %v1588
      %v1590 = vpop.f32.mrb[0].mxu0
      %v1591 = vpop.f32.mrb[0].mxu0
      %v1592 = vadd.f32 %v1352, %v1591
      %v1593 = vpop.f32.mrb[0].mxu0
      %1594 = vmatprep.mubr.bf16.mxu0 %v1147
      %1595 = vmatmul.mubr.bf16.gmra.mrb[0].mxu0 %v1035
      %v1596 = vpop.f32.mrb[0].mxu0
      %v1597 = vadd.f32 %v1352, %v1596
      %v1598 = vpop.f32.mrb[0].mxu0
      %v1599 = vpop.f32.mrb[0].mxu0
      %v1600 = vadd.f32 %v1352, %v1599
      %v1601 = vpop.f32.mrb[0].mxu0
      %1602 = vmatprep.mubr.bf16.mxu0 %v1150
      %1603 = vmatmul.mubr.bf16.gmra.mrb[0].mxu0 %v1038
      %v1604 = vpop.f32.mrb[0].mxu0
      %v1605 = vadd.f32 %v1352, %v1604
      %v1606 = vpop.f32.mrb[0].mxu0
      %v1607 = vpop.f32.mrb[0].mxu0
      %v1608 = vadd.f32 %v1352, %v1607
      %v1609 = vpop.f32.mrb[0].mxu0
      %1610 = vmatprep.mubr.bf16.mxu0 %v1153
      %1611 = vmatmul.mubr.bf16.gmra.mrb[0].mxu0 %v1041
      %v1612 = vpop.f32.mrb[0].mxu0
      %v1613 = vadd.f32 %v1352, %v1612
      %v1614 = vpop.f32.mrb[0].mxu0
      %v1615 = vpop.f32.mrb[0].mxu0
      %v1616 = vadd.f32 %v1352, %v1615
      %v1617 = vpop.f32.mrb[0].mxu0
      %1618 = vmatprep.mubr.bf16.mxu0 %v1156
      %1619 = vmatmul.mubr.bf16.gmra.mrb[0].mxu0 %v1044
      %v1620 = vpop.f32.mrb[0].mxu0
      %v1621 = vadd.f32 %v1352, %v1620
      %v1622 = vpop.f32.mrb[0].mxu0
      %v1623 = vpop.f32.mrb[0].mxu0
      %v1624 = vadd.f32 %v1352, %v1623
      %v1625 = vpop.f32.mrb[0].mxu0
      %1626 = vmatprep.mubr.bf16.mxu0 %v1159
      %1627 = vmatmul.mubr.bf16.gmra.mrb[0].mxu0 %v1047
      %v1628 = vpop.f32.mrb[0].mxu0
      %v1629 = vadd.f32 %v1352, %v1628
      %v1630 = vpop.f32.mrb[0].mxu0
      %v1631 = vpop.f32.mrb[0].mxu0
      %v1632 = vadd.f32 %v1352, %v1631
      %v1633 = vpop.f32.mrb[0].mxu0
      %1634 = vdwg.mxu0
      %1635 = vmatprep.subr.bf16.mxu0 0
      %1636 = vmatpush1.bf16.msra.mxu0 %v1498
      %1637 = vmatprep.subr.bf16.mxu0 0
      %1638 = vmatpush1.bf16.msra.mxu0 %v1499
      %1639 = vmatprep.subr.bf16.mxu0 0
      %1640 = vmatpush1.bf16.msra.mxu0 %v1500
      %1641 = vmatprep.subr.bf16.mxu0 0
      %1642 = vmatpush1.bf16.msra.mxu0 %v1501
      %1643 = vmatprep.subr.bf16.mxu0 0
      %1644 = vmatpush1.bf16.msra.mxu0 %v1502
      %1645 = vmatprep.subr.bf16.mxu0 0
      %1646 = vmatpush1.bf16.msra.mxu0 %v1503
      %1647 = vmatprep.subr.bf16.mxu0 0
      %1648 = vmatpush1.bf16.msra.mxu0 %v1504
      %1649 = vmatprep.subr.bf16.mxu0 0
      %1650 = vmatpush1.bf16.msra.mxu0 %v1505
      %1651 = vmatprep.subr.bf16.mxu0 0
      %1652 = vmatpush1.bf16.msra.mxu0 %v1506
      %1653 = vmatprep.subr.bf16.mxu0 0
      %1654 = vmatpush1.bf16.msra.mxu0 %v1507
      %1655 = vmatprep.subr.bf16.mxu0 0
      %1656 = vmatpush1.bf16.msra.mxu0 %v1508
      %1657 = vmatprep.subr.bf16.mxu0 0
      %1658 = vmatpush1.bf16.msra.mxu0 %v1509
      %1659 = vmatprep.subr.bf16.mxu0 0
      %1660 = vmatpush1.bf16.msra.mxu0 %v1510
      %1661 = vmatprep.subr.bf16.mxu0 0
      %1662 = vmatpush1.bf16.msra.mxu0 %v1511
      %1663 = vmatprep.subr.bf16.mxu0 0
      %1664 = vmatpush1.bf16.msra.mxu0 %v1512
      %1665 = vmatprep.subr.bf16.mxu0 0
      %1666 = vmatpush1.bf16.msra.mxu0 %v1513
      %1667 = vmatprep.mubr.bf16.mxu0 %v1312
      %1668 = vmatmul.mubr.bf16.gmra.mrb[0].mxu0 %v1328
      %v1669 = vpop.f32.mrb[0].mxu0
      %v1670 = vadd.f32 %v1581, %v1669
      %v1671 = vpop.f32.mrb[0].mxu0
      %v1672 = vpop.f32.mrb[0].mxu0
      %v1673 = vadd.f32 %v1584, %v1672
      %v1674 = vpop.f32.mrb[0].mxu0
      %1675 = vmatprep.mubr.bf16.mxu0 %v1313
      %1676 = vmatmul.mubr.bf16.gmra.mrb[0].mxu0 %v1331
      %v1677 = vpop.f32.mrb[0].mxu0
      %v1678 = vadd.f32 %v1589, %v1677
      %v1679 = vpop.f32.mrb[0].mxu0
      %v1680 = vpop.f32.mrb[0].mxu0
      %v1681 = vadd.f32 %v1592, %v1680
      %v1682 = vpop.f32.mrb[0].mxu0
      %1683 = vmatprep.mubr.bf16.mxu0 %v1314
      %1684 = vmatmul.mubr.bf16.gmra.mrb[0].mxu0 %v1334
      %v1685 = vpop.f32.mrb[0].mxu0
      %v1686 = vadd.f32 %v1597, %v1685
      %v1687 = vpop.f32.mrb[0].mxu0
      %v1688 = vpop.f32.mrb[0].mxu0
      %v1689 = vadd.f32 %v1600, %v1688
      %v1690 = vpop.f32.mrb[0].mxu0
      %1691 = vmatprep.mubr.bf16.mxu0 %v1315
      %1692 = vmatmul.mubr.bf16.gmra.mrb[0].mxu0 %v1337
      %v1693 = vpop.f32.mrb[0].mxu0
      %v1694 = vadd.f32 %v1605, %v1693
      %v1695 = vpop.f32.mrb[0].mxu0
      %v1696 = vpop.f32.mrb[0].mxu0
      %v1697 = vadd.f32 %v1608, %v1696
      %v1698 = vpop.f32.mrb[0].mxu0
      %1699 = vmatprep.mubr.bf16.mxu0 %v1316
      %1700 = vmatmul.mubr.bf16.gmra.mrb[0].mxu0 %v1340
      %v1701 = vpop.f32.mrb[0].mxu0
      %v1702 = vadd.f32 %v1613, %v1701
      %v1703 = vpop.f32.mrb[0].mxu0
      %v1704 = vpop.f32.mrb[0].mxu0
      %v1705 = vadd.f32 %v1616, %v1704
      %v1706 = vpop.f32.mrb[0].mxu0
      %1707 = vmatprep.mubr.bf16.mxu0 %v1317
      %1708 = vmatmul.mubr.bf16.gmra.mrb[0].mxu0 %v1343
      %v1709 = vpop.f32.mrb[0].mxu0
      %v1710 = vadd.f32 %v1621, %v1709
      %v1711 = vpop.f32.mrb[0].mxu0
      %v1712 = vpop.f32.mrb[0].mxu0
      %v1713 = vadd.f32 %v1624, %v1712
      %v1714 = vpop.f32.mrb[0].mxu0
      %1715 = vmatprep.mubr.bf16.mxu0 %v1318
      %1716 = vmatmul.mubr.bf16.gmra.mrb[0].mxu0 %v1346
      %v1717 = vpop.f32.mrb[0].mxu0
      %v1718 = vadd.f32 %v1629, %v1717
      %v1719 = vpop.f32.mrb[0].mxu0
      %v1720 = vpop.f32.mrb[0].mxu0
      %v1721 = vadd.f32 %v1632, %v1720
      %v1722 = vpop.f32.mrb[0].mxu0
      %1723 = vdwg.mxu0
      %vm1724 = vcmp.gt.f32.partialorder %v1670, 0.0
      %vm1725 = vcmp.gt.f32.partialorder %v1673, 0.0
      %vm1726 = vcmp.gt.f32.partialorder %v1678, 0.0
      %vm1727 = vcmp.gt.f32.partialorder %v1681, 0.0
      %vm1728 = vcmp.gt.f32.partialorder %v1686, 0.0
      %vm1729 = vcmp.gt.f32.partialorder %v1689, 0.0
      %vm1730 = vcmp.gt.f32.partialorder %v1694, 0.0
      %vm1731 = vcmp.gt.f32.partialorder %v1697, 0.0
      %vm1732 = vcmp.gt.f32.partialorder %v1702, 0.0
      %vm1733 = vcmp.gt.f32.partialorder %v1705, 0.0
      %vm1734 = vcmp.gt.f32.partialorder %v1710, 0.0
      %vm1735 = vcmp.gt.f32.partialorder %v1713, 0.0
      %vm1736 = vcmp.gt.f32.partialorder %v1718, 0.0
      %vm1737 = vcmp.gt.f32.partialorder %v1721, 0.0
      %v1738 = vmin.f32 %v1670, 0.0
      %v1739 = vmin.f32 %v1673, 0.0
      %v1740 = vmin.f32 %v1678, 0.0
      %v1741 = vmin.f32 %v1681, 0.0
      %v1742 = vmin.f32 %v1686, 0.0
      %v1743 = vmin.f32 %v1689, 0.0
      %v1744 = vmin.f32 %v1694, 0.0
      %v1745 = vmin.f32 %v1697, 0.0
      %v1746 = vmin.f32 %v1702, 0.0
      %v1747 = vmin.f32 %v1705, 0.0
      %v1748 = vmin.f32 %v1710, 0.0
      %v1749 = vmin.f32 %v1713, 0.0
      %v1750 = vmin.f32 %v1718, 0.0
      %v1751 = vmin.f32 %v1721, 0.0
      %v1752 = vmul.f32 %v1738, 1.442695
      %v1753 = vpow.pop %v1752
      %v1754 = vmul.f32 %v1739, 1.442695
      %v1755 = vpow.pop %v1754
      %v1756 = vmul.f32 %v1740, 1.442695
      %v1757 = vpow.pop %v1756
      %v1758 = vmul.f32 %v1741, 1.442695
      %v1759 = vpow.pop %v1758
      %v1760 = vmul.f32 %v1742, 1.442695
      %v1761 = vpow.pop %v1760
      %v1762 = vmul.f32 %v1743, 1.442695
      %v1763 = vpow.pop %v1762
      %v1764 = vmul.f32 %v1744, 1.442695
      %v1765 = vpow.pop %v1764
      %v1766 = vmul.f32 %v1745, 1.442695
      %v1767 = vpow.pop %v1766
      %v1768 = vmul.f32 %v1746, 1.442695
      %v1769 = vpow.pop %v1768
      %v1770 = vmul.f32 %v1747, 1.442695
      %v1771 = vpow.pop %v1770
      %v1772 = vmul.f32 %v1748, 1.442695
      %v1773 = vpow.pop %v1772
      %v1774 = vmul.f32 %v1749, 1.442695
      %v1775 = vpow.pop %v1774
      %v1776 = vmul.f32 %v1750, 1.442695
      %v1777 = vpow.pop %v1776
      %v1778 = vmul.f32 %v1751, 1.442695
      %v1779 = vpow.pop %v1778
      %v1780 = vsub.f32 %v1753, 1.0
      %v1781 = vsub.f32 %v1755, 1.0
      %v1782 = vsub.f32 %v1757, 1.0
      %v1783 = vsub.f32 %v1759, 1.0
      %v1784 = vsub.f32 %v1761, 1.0
      %v1785 = vsub.f32 %v1763, 1.0
      %v1786 = vsub.f32 %v1765, 1.0
      %v1787 = vsub.f32 %v1767, 1.0
      %v1788 = vsub.f32 %v1769, 1.0
      %v1789 = vsub.f32 %v1771, 1.0
      %v1790 = vsub.f32 %v1773, 1.0
      %v1791 = vsub.f32 %v1775, 1.0
      %v1792 = vsub.f32 %v1777, 1.0
      %v1793 = vsub.f32 %v1779, 1.0
      %v1794 = vsel %vm1724, %v1670, %v1780
      %v1795 = vsel %vm1725, %v1673, %v1781
      %v1796 = vsel %vm1726, %v1678, %v1782
      %v1797 = vsel %vm1727, %v1681, %v1783
      %v1798 = vsel %vm1728, %v1686, %v1784
      %v1799 = vsel %vm1729, %v1689, %v1785
      %v1800 = vsel %vm1730, %v1694, %v1786
      %v1801 = vsel %vm1731, %v1697, %v1787
      %v1802 = vsel %vm1732, %v1702, %v1788
      %v1803 = vsel %vm1733, %v1705, %v1789
      %v1804 = vsel %vm1734, %v1710, %v1790
      %v1805 = vsel %vm1735, %v1713, %v1791
      %v1806 = vsel %vm1736, %v1718, %v1792
      %v1807 = vsel %vm1737, %v1721, %v1793
      %vm1808 = vcmask 859136
      %v1810 = vsel %vm1808, %v316, 0
      %vm1812 = vcmask 1040384
      %v1814 = vsel %vm1812, %v1807, 0
      %1816 = vmatprep.subr.mxu0 0.0
      %1817 = vmatpush1.msra.mxu0 %v1794
      %1818 = vmatprep.subr.mxu0 0.0
      %1819 = vmatpush1.msra.mxu0 %v1795
      %1820 = vmatprep.subr.mxu0 0.0
      %1821 = vmatpush1.msra.mxu0 %v1796
      %1822 = vmatprep.subr.mxu0 0.0
      %1823 = vmatpush1.msra.mxu0 %v1797
      %1824 = vmatprep.subr.mxu0 0.0
      %1825 = vmatpush1.msra.mxu0 %v1798
      %1826 = vmatprep.subr.mxu0 0.0
      %1827 = vmatpush1.msra.mxu0 %v1799
      %1828 = vmatprep.subr.mxu0 0.0
      %1829 = vmatpush1.msra.mxu0 %v1800
      %1830 = vmatprep.subr.mxu0 0.0
      %1831 = vmatpush1.msra.mxu0 %v1801
      %1832 = vmatprep.subr.mxu0 0.0
      %1833 = vmatpush1.msra.mxu0 %v1802
      %1834 = vmatprep.subr.mxu0 0.0
      %1835 = vmatpush1.msra.mxu0 %v1803
      %1836 = vmatprep.subr.mxu0 0.0
      %1837 = vmatpush1.msra.mxu0 %v1804
      %1838 = vmatprep.subr.mxu0 0.0
      %1839 = vmatpush1.msra.mxu0 %v1805
      %1840 = vmatprep.subr.mxu0 0.0
      %1841 = vmatpush1.msra.mxu0 %v1806
      %1842 = vmatprep.subr.mxu0 0.0
      %1843 = vmatpush1.msra.mxu0 %v1814
      %1844 = vmatprep.subr.mxu0 0.0
      %1845 = vmatpush1.msra.mxu0 0.0
      %1846 = vmatprep.subr.mxu0 0.0
      %1847 = vmatpush1.msra.mxu0 0.0
      %1848 = vmatprep.subr.mxu0 0.0
      %1849 = vmatpush1.msra.mxu0 0.0
      %1850 = vmatprep.subr.mxu0 0.0
      %1851 = vmatpush1.msra.mxu0 0.0
      %1852 = vmatprep.subr.mxu0 0.0
      %1853 = vmatpush1.msra.mxu0 0.0
      %1854 = vmatprep.subr.mxu0 0.0
      %1855 = vmatpush1.msra.mxu0 0.0
      %1856 = vmatprep.subr.mxu0 0.0
      %1857 = vmatpush1.msra.mxu0 0.0
      %1858 = vmatprep.subr.mxu0 0.0
      %1859 = vmatpush1.msra.mxu0 0.0
      %1860 = vmatprep.subr.mxu0 0.0
      %1861 = vmatpush1.msra.mxu0 0.0
      %1862 = vmatprep.subr.mxu0 0.0
      %1863 = vmatpush1.msra.mxu0 0.0
      %1864 = vmatprep.subr.mxu0 0.0
      %1865 = vmatpush1.msra.mxu0 0.0
      %1866 = vmatprep.subr.mxu0 0.0
      %1867 = vmatpush1.msra.mxu0 0.0
      %1868 = vmatprep.subr.mxu0 0.0
      %1869 = vmatpush1.msra.mxu0 0.0
      %1870 = vmatprep.subr.mxu0 0.0
      %1871 = vmatpush1.msra.mxu0 0.0
      %1872 = vmatprep.subr.mxu0 0.0
      %1873 = vmatpush1.msra.mxu0 0.0
      %1874 = vmatprep.subr.mxu0 0.0
      %1875 = vmatpush1.msra.mxu0 0.0
      %1876 = vmatprep.subr.mxu0 0.0
      %1877 = vmatpush1.msra.mxu0 0.0
      %1878 = vmatprep.subr.mxu0 0.0
      %1879 = vmatpush1.msra.mxu0 0.0
      %1880 = vmatprep.mubr.f32.mxu0 0.0
      %1881 = vmatmul.mubr.f32.gmra.mrb[0].mxu0 %v1810
      %v1882 = vpop.f32.mrb[0].mxu0
      %v1883 = vadd.f32 0.0, %v1882
      %v1884 = vpop.f32.mrb[0].mxu0
      %1885 = vdwg.mxu0
      %v1887 = vlaneseq
      %v1888 = vshrl.u32 %v1887, 7
      %v1889 = vsub.s32 0, %v1888
      %v1890 = vrot.slane %v322, %v1889
      %vm1892 = vcmask 326656
      %v1894 = vsel %vm1892, %v1883, 0
      %1896 = vmatprep.subr.mxu0 0.0
      %1897 = vmatpush1.msra.mxu0 %v317
      %1898 = vmatprep.subr.mxu0 0.0
      %1899 = vmatpush1.msra.mxu0 %v318
      %1900 = vmatprep.subr.mxu0 0.0
      %1901 = vmatpush1.msra.mxu0 %v319
      %1902 = vmatprep.subr.mxu0 0.0
      %1903 = vmatpush1.msra.mxu0 %v320
      %1904 = vmatprep.subr.mxu0 0.0
      %1905 = vmatpush1.msra.mxu0 %v321
      %1906 = vmatprep.subr.mxu0 0.0
      %1907 = vmatpush1.msra.mxu0 0.0
      %1908 = vmatprep.subr.mxu0 0.0
      %1909 = vmatpush1.msra.mxu0 0.0
      %1910 = vmatprep.subr.mxu0 0.0
      %1911 = vmatpush1.msra.mxu0 0.0
      %1912 = vmatprep.subr.mxu0 0.0
      %1913 = vmatpush1.msra.mxu0 0.0
      %1914 = vmatprep.subr.mxu0 0.0
      %1915 = vmatpush1.msra.mxu0 0.0
      %1916 = vmatprep.subr.mxu0 0.0
      %1917 = vmatpush1.msra.mxu0 0.0
      %1918 = vmatprep.subr.mxu0 0.0
      %1919 = vmatpush1.msra.mxu0 0.0
      %1920 = vmatprep.subr.mxu0 0.0
      %1921 = vmatpush1.msra.mxu0 0.0
      %1922 = vmatprep.subr.mxu0 0.0
      %1923 = vmatpush1.msra.mxu0 0.0
      %1924 = vmatprep.subr.mxu0 0.0
      %1925 = vmatpush1.msra.mxu0 0.0
      %1926 = vmatprep.subr.mxu0 0.0
      %1927 = vmatpush1.msra.mxu0 0.0
      %1928 = vmatprep.subr.mxu0 0.0
      %1929 = vmatpush1.msra.mxu0 0.0
      %1930 = vmatprep.subr.mxu0 0.0
      %1931 = vmatpush1.msra.mxu0 0.0
      %1932 = vmatprep.subr.mxu0 0.0
      %1933 = vmatpush1.msra.mxu0 0.0
      %1934 = vmatprep.subr.mxu0 0.0
      %1935 = vmatpush1.msra.mxu0 0.0
      %1936 = vmatprep.subr.mxu0 0.0
      %1937 = vmatpush1.msra.mxu0 0.0
      %1938 = vmatprep.subr.mxu0 0.0
      %1939 = vmatpush1.msra.mxu0 0.0
      %1940 = vmatprep.subr.mxu0 0.0
      %1941 = vmatpush1.msra.mxu0 0.0
      %1942 = vmatprep.subr.mxu0 0.0
      %1943 = vmatpush1.msra.mxu0 0.0
      %1944 = vmatprep.subr.mxu0 0.0
      %1945 = vmatpush1.msra.mxu0 0.0
      %1946 = vmatprep.subr.mxu0 0.0
      %1947 = vmatpush1.msra.mxu0 0.0
      %1948 = vmatprep.subr.mxu0 0.0
      %1949 = vmatpush1.msra.mxu0 0.0
      %1950 = vmatprep.subr.mxu0 0.0
      %1951 = vmatpush1.msra.mxu0 0.0
      %1952 = vmatprep.subr.mxu0 0.0
      %1953 = vmatpush1.msra.mxu0 0.0
      %1954 = vmatprep.subr.mxu0 0.0
      %1955 = vmatpush1.msra.mxu0 0.0
      %1956 = vmatprep.subr.mxu0 0.0
      %1957 = vmatpush1.msra.mxu0 0.0
      %1958 = vmatprep.subr.mxu0 0.0
      %1959 = vmatpush1.msra.mxu0 0.0
      %1960 = vmatprep.mubr.f32.mxu0 0.0
      %1961 = vmatmul.mubr.f32.gmra.mrb[0].mxu0 %v1894
      %v1962 = vpop.f32.mrb[0].mxu0
      %v1963 = vadd.f32 %v1890, %v1962
      %v1964 = vpop.f32.mrb[0].mxu0
      %1965 = vdwg.mxu0
      %vm1966 = vcmask 321536
      %1967 = vst.msk [vmem:[%s249] sm:$0x7] %vm1966, %v1963
      %p1968 = scmp.lt.s32.totalorder %s17, 1
      %s1969 = scalar_select %p1968, %s17, 1
      %s1970 = smul.addr %s1969, 4
      %s1971 = scalar_lea.vmem %s6, %s1970
      // Predicated region
      $region45: #{tpu_custom_call.1} parent=43 // pred_check
        %p1972 = pneg %p166
      $region46: #{tpu_custom_call.1} parent=43 // pred_check_branch
        %1974 = sbr.rel (%p1972) target = $region48
      $region47: #{tpu_custom_call.1} parent=43 // pred_region
        _
      $region48: #{tpu_custom_call.1} parent=43 // pred_fallthru
        _
    $region44: #{tpu_custom_call.1} parent=5 // pred_fallthru
      _
    %p1975 = scmp.le.s32.totalorder 2, %s12
    // Predicated region
    $region49: #{tpu_custom_call.1} parent=5 // pred_check
      %p1976 = pneg %p1975
    $region50: #{tpu_custom_call.1} parent=5 // pred_check_branch
      %1978 = sbr.rel (%p1976) target = $region52
    $region51: #{tpu_custom_call.1} parent=5 // pred_region
      %s1979 = ssub.s32 %s12, 2
      // Predicated region
      $region53: #{tpu_custom_call.1} parent=51 // pred_check
        %p1980 = pneg %p172
      $region54: #{tpu_custom_call.1} parent=51 // pred_check_branch
        %1982 = sbr.rel (%p1980) target = $region56
      $region55: #{tpu_custom_call.1} parent=51 // pred_region
        %p1983 = scmp.lt.s32.totalorder %s18, 1
        %s1984 = scalar_select %p1983, %s18, 1
        %s1985 = smul.addr %s1984, 4
        %s1986 = scalar_lea.vmem %s6, %s1985
      $region56: #{tpu_custom_call.1} parent=51 // pred_fallthru
        _
    $region52: #{tpu_custom_call.1} parent=5 // pred_fallthru
      _
  $region6: #{tpu_custom_call.1} parent=0 // loop_footer
    %s16 = sadd.s32 1, %s12
  $region7: #{tpu_custom_call.1} parent=0 // loop_footer_branch
    %11 = sbr.rel target = $region3
  $region8: #{tpu_custom_call.1} parent=0 // loop_exit
    _

</llo_original>
